<compile_context>
chip_gen: v7x
topology: tpu7x:2x2x1
jax: 0.10.0
libtpu: 0.0.40
codegen_flags: <defaults>
</compile_context>

<pallas_src>
import jax
import jax.numpy as jnp
from jax.experimental import pallas as pl
from jax.experimental.pallas import tpu as pltpu

EPS = 1e-5


def _bn_relu(h, gamma, beta):
    # BatchNorm1d, training-mode batch stats, one-pass (E[x^2] - E[x]^2)
    # biased variance, then affine + ReLU.
    mean = jnp.mean(h, axis=0, keepdims=True)
    mean_sq = jnp.mean(h * h, axis=0, keepdims=True)
    var = jnp.maximum(mean_sq - mean * mean, 0.0)
    hn = (h - mean) * jax.lax.rsqrt(var + EPS)
    return jnp.maximum(hn * gamma + beta, 0.0)


def generator_kernel(
    x_ref,
    w1_ref, b1_ref, g1_ref, be1_ref,
    w2_ref, b2_ref, g2_ref, be2_ref,
    w3_ref, b3_ref, g3_ref, be3_ref,
    wh_ref, bh_ref,
    out_ref,
    acc_ref,
):
    n = pl.program_id(0)

    # ---- init running-max accumulator on the first point-tile ----
    @pl.when(n == 0)
    def _():
        acc_ref[...] = jnp.full(acc_ref.shape, -jnp.inf, acc_ref.dtype)

    # ---- streaming max over the point axis (dim=1 in torch) ----
    xt = x_ref[...].astype(jnp.float32)                    # (B, TN, D) bf16 -> f32
    acc_ref[...] = jnp.maximum(acc_ref[...], jnp.max(xt, axis=1))

    # ---- MLP + fused projection heads only on the last tile ----
    @pl.when(n == pl.num_programs(0) - 1)
    def _():
        h = acc_ref[...]                                   # (B, D)

        h = jnp.dot(h, w1_ref[...], preferred_element_type=jnp.float32) + b1_ref[...]
        h = _bn_relu(h, g1_ref[...], be1_ref[...])

        h = jnp.dot(h, w2_ref[...], preferred_element_type=jnp.float32) + b2_ref[...]
        h = _bn_relu(h, g2_ref[...], be2_ref[...])

        h = jnp.dot(h, w3_ref[...], preferred_element_type=jnp.float32) + b3_ref[...]
        h = _bn_relu(h, g3_ref[...], be3_ref[...])

        # fused heads: columns [0:4] = rotation, [4:7] = translation, [7] = pad
        head = jnp.dot(h, wh_ref[...], preferred_element_type=jnp.float32) + bh_ref[...]

        rot = head[:, :4]
        inv_norm = jax.lax.rsqrt(jnp.sum(rot * rot, axis=1, keepdims=True))
        lane = jax.lax.broadcasted_iota(jnp.int32, head.shape, 1)
        out_ref[...] = jnp.where(lane < 4, head * inv_norm, head)


def generator_forward(x, params, *, tn=None, stream_bf16=True):
    """x: (B, N, D) float32; params: flat tuple mirroring the torch module.

    Returns (rotation (B,4), translation (B,3)).
    """
    (w1, b1, g1, be1,
     w2, b2, g2, be2,
     w3, b3, g3, be3,
     wr, br, wt, bt) = params

    B, N, D = x.shape
    d1, d2, d3 = w1.shape[1], w2.shape[1], w3.shape[1]

    # Fuse the two projection heads into a single lane-padded (d3, 8) matmul.
    wh = jnp.zeros((d3, 8), jnp.float32).at[:, :4].set(wr).at[:, 4:7].set(wt)
    bh = jnp.zeros((1, 8), jnp.float32).at[:, :4].set(br).at[:, 4:7].set(bt)

    # Stream x as bf16 to halve HBM traffic (upcast to f32 inside the kernel).
    x_dtype = jnp.bfloat16 if stream_bf16 else jnp.float32
    xs = x.astype(x_dtype)
    elem = jnp.dtype(x_dtype).itemsize

    # Pick a point-tile size that keeps double-buffered x tiles well under the
    # scoped-VMEM default on every generation (v7x has half the VMEM of v6e).
    if tn is None:
        budget = 4 << 20                                   # per-buffer x budget
        tn = max(16, min(int(budget // (2 * B * D * elem)), N))
    tn = int(tn)
    align = 16 if stream_bf16 else 8
    tn = max(align, (tn // align) * align)

    n_pad = pl.cdiv(N, tn) * tn
    if n_pad != N:
        # -inf padding is ignored by the running max.
        xs = jnp.pad(xs, ((0, 0), (0, n_pad - N), (0, 0)),
                     constant_values=-jnp.inf)
    grid = (n_pad // tn,)

    # x streams per grid step; params are DMA'd once and stay VMEM-resident.
    x_spec = pl.BlockSpec((B, tn, D), lambda n: (0, n, 0))
    small_params = [w1, b1, g1, be1, w2, b2, g2, be2, w3, b3, g3, be3, wh, bh]
    param_specs = [pl.BlockSpec(p.shape, lambda n: (0, 0)) for p in small_params]
    out_spec = pl.BlockSpec((B, 8), lambda n: (0, 0))

    flops = 2 * B * (D * d1 + d1 * d2 + d2 * d3 + d3 * 8) + B * n_pad * D
    transcendentals = d1 + d2 + d3 + B
    bytes_accessed = (xs.size * elem
                      + sum(int(p.size) * 4 for p in small_params)
                      + B * 8 * 4)

    # TODO(synk): on v7x, split the streaming-max phase across both TensorCores
    # (leading size-2 "parallel" axis + partial-max combine epilogue).
    out = pl.pallas_call(
        generator_kernel,
        out_shape=jax.ShapeDtypeStruct((B, 8), jnp.float32),
        grid_spec=pltpu.PrefetchScalarGridSpec(
            num_scalar_prefetch=0,
            grid=grid,
            in_specs=[x_spec] + param_specs,
            out_specs=out_spec,
            scratch_shapes=[pltpu.VMEM((B, D), jnp.float32)],
        ),
        compiler_params=pltpu.CompilerParams(
            dimension_semantics=("arbitrary",),
        ),
        cost_estimate=pl.CostEstimate(
            flops=int(flops),
            transcendentals=int(transcendentals),
            bytes_accessed=int(bytes_accessed),
        ),
    )(xs, *small_params)

    rotation = out[:, :4]
    translation = out[:, 4:7]
    return rotation, translation


def init_params(key, emb_dims):
    """Deterministic synthetic parameters mirroring the torch module shapes."""
    d1, d2, d3 = emb_dims // 2, emb_dims // 4, emb_dims // 8
    keys = jax.random.split(key, 5)

    def lin(k, fan_in, fan_out):
        bound = 1.0 / jnp.sqrt(fan_in)
        kw, kb = jax.random.split(k)
        w = jax.random.uniform(kw, (fan_in, fan_out), jnp.float32, -bound, bound)
        b = jax.random.uniform(kb, (1, fan_out), jnp.float32, -bound, bound)
        return w, b

    w1, b1 = lin(keys[0], emb_dims, d1)
    w2, b2 = lin(keys[1], d1, d2)
    w3, b3 = lin(keys[2], d2, d3)
    wr, br = lin(keys[3], d3, 4)
    wt, bt = lin(keys[4], d3, 3)

    def bn(dim):
        return jnp.ones((1, dim), jnp.float32), jnp.zeros((1, dim), jnp.float32)

    g1, be1 = bn(d1)
    g2, be2 = bn(d2)
    g3, be3 = bn(d3)

    return (w1, b1, g1, be1, w2, b2, g2, be2, w3, b3, g3, be3, wr, br, wt, bt)


def reference_forward(x, params):
    """Pure-JAX reference (same math as the kernel)."""
    (w1, b1, g1, be1, w2, b2, g2, be2, w3, b3, g3, be3, wr, br, wt, bt) = params
    h = jnp.max(x, axis=1)
    h = _bn_relu(h @ w1 + b1, g1, be1)
    h = _bn_relu(h @ w2 + b2, g2, be2)
    h = _bn_relu(h @ w3 + b3, g3, be3)
    rot = h @ wr + br
    trans = h @ wt + bt
    rot = rot * jax.lax.rsqrt(jnp.sum(rot * rot, axis=1, keepdims=True))
    return rot, trans


if __name__ == "__main__":
    emb_dims = 128            # MLP: 128 -> 64 -> 32 -> 16
    B, N = 8, 200             # N not a tile multiple → exercises -inf padding

    key = jax.random.PRNGKey(0)
    kx, kp = jax.random.split(key)
    x = jax.random.normal(kx, (B, N, emb_dims), jnp.float32)
    params = init_params(kp, emb_dims)

    # tn=128 → 2 grid steps: exercises init / accumulate / epilogue paths.
    rotation, translation = generator_forward(x, params, tn=128)
    jax.block_until_ready((rotation, translation))

    assert rotation.shape == (B, 4) and translation.shape == (B, 3)

    # Compare against a pure-JAX reference fed the same bf16-quantized input.
    x_q = x.astype(jnp.bfloat16).astype(jnp.float32)
    ref_rot, ref_trans = reference_forward(x_q, params)
    assert bool(jnp.allclose(rotation, ref_rot, atol=2e-3, rtol=2e-3))
    assert bool(jnp.allclose(translation, ref_trans, atol=2e-3, rtol=2e-3))

    # rotations should be unit quaternions
    norms = jnp.linalg.norm(rotation, axis=1)
    assert bool(jnp.all(jnp.abs(norms - 1.0) < 1e-3))

    print("KERNEL_OK")
</pallas_src>

<mosaic_0001>
module attributes {stable_mosaic.version = 11 : i64} {
  func.func @generator_kernel(%arg0: i32, %arg1: memref<8x128x128xbf16, #tpu.memory_space<vmem>>, %arg2: memref<128x64xf32, #tpu.memory_space<vmem>>, %arg3: memref<1x64xf32, #tpu.memory_space<vmem>>, %arg4: memref<1x64xf32, #tpu.memory_space<vmem>>, %arg5: memref<1x64xf32, #tpu.memory_space<vmem>>, %arg6: memref<64x32xf32, #tpu.memory_space<vmem>>, %arg7: memref<1x32xf32, #tpu.memory_space<vmem>>, %arg8: memref<1x32xf32, #tpu.memory_space<vmem>>, %arg9: memref<1x32xf32, #tpu.memory_space<vmem>>, %arg10: memref<32x16xf32, #tpu.memory_space<vmem>>, %arg11: memref<1x16xf32, #tpu.memory_space<vmem>>, %arg12: memref<1x16xf32, #tpu.memory_space<vmem>>, %arg13: memref<1x16xf32, #tpu.memory_space<vmem>>, %arg14: memref<16x8xf32, #tpu.memory_space<vmem>>, %arg15: memref<1x8xf32, #tpu.memory_space<vmem>>, %arg16: memref<8x8xf32, #tpu.memory_space<vmem>>, %arg17: memref<8x128xf32, #tpu.memory_space<vmem>>) attributes {dimension_semantics = [#tpu.dimension_semantics<arbitrary>], iteration_bounds = array<i64: 2>, scalar_prefetch = 0 : i64, scratch_operands = 1 : i64, tpu.core_type = #tpu.core_type<tc>, window_params = [{transform_indices = @transform_0, window_bounds = array<i64: 8, 128, 128>}, {pipeline_mode = #tpu.pipeline_mode<synchronous>, transform_indices = @transform_1, window_bounds = array<i64: 128, 64>}, {pipeline_mode = #tpu.pipeline_mode<synchronous>, transform_indices = @transform_2, window_bounds = array<i64: 1, 64>}, {pipeline_mode = #tpu.pipeline_mode<synchronous>, transform_indices = @transform_3, window_bounds = array<i64: 1, 64>}, {pipeline_mode = #tpu.pipeline_mode<synchronous>, transform_indices = @transform_4, window_bounds = array<i64: 1, 64>}, {pipeline_mode = #tpu.pipeline_mode<synchronous>, transform_indices = @transform_5, window_bounds = array<i64: 64, 32>}, {pipeline_mode = #tpu.pipeline_mode<synchronous>, transform_indices = @transform_6, window_bounds = array<i64: 1, 32>}, {pipeline_mode = #tpu.pipeline_mode<synchronous>, transform_indices = @transform_7, window_bounds = array<i64: 1, 32>}, {pipeline_mode = #tpu.pipeline_mode<synchronous>, transform_indices = @transform_8, window_bounds = array<i64: 1, 32>}, {pipeline_mode = #tpu.pipeline_mode<synchronous>, transform_indices = @transform_9, window_bounds = array<i64: 32, 16>}, {pipeline_mode = #tpu.pipeline_mode<synchronous>, transform_indices = @transform_10, window_bounds = array<i64: 1, 16>}, {pipeline_mode = #tpu.pipeline_mode<synchronous>, transform_indices = @transform_11, window_bounds = array<i64: 1, 16>}, {pipeline_mode = #tpu.pipeline_mode<synchronous>, transform_indices = @transform_12, window_bounds = array<i64: 1, 16>}, {pipeline_mode = #tpu.pipeline_mode<synchronous>, transform_indices = @transform_13, window_bounds = array<i64: 16, 8>}, {pipeline_mode = #tpu.pipeline_mode<synchronous>, transform_indices = @transform_14, window_bounds = array<i64: 1, 8>}, {pipeline_mode = #tpu.pipeline_mode<synchronous>, transform_indices = @transform_15, window_bounds = array<i64: 8, 8>}]} {
    %c0_i32 = arith.constant 0 : i32
    %0 = arith.cmpi eq, %arg0, %c0_i32 : i32
    %1 = arith.extui %0 : i1 to i32
    %c0_i32_0 = arith.constant 0 : i32
    %2 = arith.cmpi ne, %1, %c0_i32_0 : i32
    scf.if %2 {
      %cst_8 = arith.constant 0xFF800000 : f32
      %12 = vector.broadcast %cst_8 : f32 to vector<8x128xf32>
      %c0_9 = arith.constant 0 : index
      %c0_10 = arith.constant 0 : index
      %13 = vector.load %arg17[%c0_9, %c0_10] : memref<8x128xf32, #tpu.memory_space<vmem>>, vector<8x128xf32>
      tpu.vector_store %arg17[%c0_9, %c0_10], %12 {strides = array<i32>} : memref<8x128xf32, #tpu.memory_space<vmem>>, vector<8x128xf32>,
    } else {
    }
    %c0 = arith.constant 0 : index
    %c0_1 = arith.constant 0 : index
    %c0_2 = arith.constant 0 : index
    %3 = vector.load %arg1[%c0, %c0_1, %c0_2] : memref<8x128x128xbf16, #tpu.memory_space<vmem>>, vector<8x128x128xbf16>
    %4 = arith.extf %3 : vector<8x128x128xbf16> to vector<8x128x128xf32>
    %c0_3 = arith.constant 0 : index
    %c0_4 = arith.constant 0 : index
    %5 = vector.load %arg17[%c0_3, %c0_4] : memref<8x128xf32, #tpu.memory_space<vmem>>, vector<8x128xf32>
    %cst = arith.constant dense<0xFF800000> : vector<8x128xf32>
    %6 = vector.multi_reduction <maximumf>, %4, %cst [1] : vector<8x128x128xf32> to vector<8x128xf32>
    %7 = arith.maximumf %5, %6 : vector<8x128xf32>
    %c0_5 = arith.constant 0 : index
    %c0_6 = arith.constant 0 : index
    %8 = vector.load %arg17[%c0_5, %c0_6] : memref<8x128xf32, #tpu.memory_space<vmem>>, vector<8x128xf32>
    tpu.vector_store %arg17[%c0_5, %c0_6], %7 {strides = array<i32>} : memref<8x128xf32, #tpu.memory_space<vmem>>, vector<8x128xf32>,
    %c1_i32 = arith.constant 1 : i32
    %9 = arith.cmpi eq, %arg0, %c1_i32 : i32
    %10 = arith.extui %9 : i1 to i32
    %c0_i32_7 = arith.constant 0 : i32
    %11 = arith.cmpi ne, %10, %c0_i32_7 : i32
    scf.if %11 {
      %c0_8 = arith.constant 0 : index
      %c0_9 = arith.constant 0 : index
      %12 = vector.load %arg17[%c0_8, %c0_9] : memref<8x128xf32, #tpu.memory_space<vmem>>, vector<8x128xf32>
      %c0_10 = arith.constant 0 : index
      %c0_11 = arith.constant 0 : index
      %13 = vector.load %arg2[%c0_10, %c0_11] : memref<128x64xf32, #tpu.memory_space<vmem>>, vector<128x64xf32>
      %cst_12 = arith.constant dense<0.000000e+00> : vector<8x64xf32>
      %14 = tpu.matmul %12, %13, %cst_12 {dimension_numbers = #tpu.dot_dimension_numbers<[1], [0], [0], [1], [0, 0, 1, 1], [], []>} : vector<8x128xf32>, vector<128x64xf32>, vector<8x64xf32> -> vector<8x64xf32>
      %c0_13 = arith.constant 0 : index
      %c0_14 = arith.constant 0 : index
      %15 = vector.load %arg3[%c0_13, %c0_14] : memref<1x64xf32, #tpu.memory_space<vmem>>, vector<1x64xf32>
      %16 = vector.broadcast %15 : vector<1x64xf32> to vector<8x64xf32>
      %17 = arith.addf %14, %16 : vector<8x64xf32>
      %c0_15 = arith.constant 0 : index
      %c0_16 = arith.constant 0 : index
      %18 = vector.load %arg4[%c0_15, %c0_16] : memref<1x64xf32, #tpu.memory_space<vmem>>, vector<1x64xf32>
      %c0_17 = arith.constant 0 : index
      %c0_18 = arith.constant 0 : index
      %19 = vector.load %arg5[%c0_17, %c0_18] : memref<1x64xf32, #tpu.memory_space<vmem>>, vector<1x64xf32>
      %cst_19 = arith.constant dense<0.000000e+00> : vector<64xf32>
      %20 = vector.multi_reduction <add>, %17, %cst_19 [0] : vector<8x64xf32> to vector<64xf32>
      %21 = vector.shape_cast %20 : vector<64xf32> to vector<1x64xf32>
      %cst_20 = arith.constant 8.000000e+00 : f32
      %22 = vector.broadcast %cst_20 : f32 to vector<1x64xf32>
      %23 = arith.divf %21, %22 : vector<1x64xf32>
      %24 = arith.mulf %17, %17 : vector<8x64xf32>
      %cst_21 = arith.constant dense<0.000000e+00> : vector<64xf32>
      %25 = vector.multi_reduction <add>, %24, %cst_21 [0] : vector<8x64xf32> to vector<64xf32>
      %26 = vector.shape_cast %25 : vector<64xf32> to vector<1x64xf32>
      %cst_22 = arith.constant 8.000000e+00 : f32
      %27 = vector.broadcast %cst_22 : f32 to vector<1x64xf32>
      %28 = arith.divf %26, %27 : vector<1x64xf32>
      %29 = arith.mulf %23, %23 : vector<1x64xf32>
      %30 = arith.subf %28, %29 : vector<1x64xf32>
      %cst_23 = arith.constant 0.000000e+00 : f32
      %31 = vector.broadcast %cst_23 : f32 to vector<1x64xf32>
      %32 = arith.maximumf %30, %31 : vector<1x64xf32>
      %33 = vector.broadcast %23 : vector<1x64xf32> to vector<8x64xf32>
      %34 = arith.subf %17, %33 : vector<8x64xf32>
      %cst_24 = arith.constant 9.99999974E-6 : f32
      %35 = vector.broadcast %cst_24 : f32 to vector<1x64xf32>
      %36 = arith.addf %32, %35 : vector<1x64xf32>
      %37 = math.rsqrt %36 : vector<1x64xf32>
      %38 = vector.broadcast %37 : vector<1x64xf32> to vector<8x64xf32>
      %39 = arith.mulf %34, %38 : vector<8x64xf32>
      %40 = vector.broadcast %18 : vector<1x64xf32> to vector<8x64xf32>
      %41 = arith.mulf %39, %40 : vector<8x64xf32>
      %42 = vector.broadcast %19 : vector<1x64xf32> to vector<8x64xf32>
      %43 = arith.addf %41, %42 : vector<8x64xf32>
      %cst_25 = arith.constant 0.000000e+00 : f32
      %44 = vector.broadcast %cst_25 : f32 to vector<8x64xf32>
      %45 = arith.maximumf %43, %44 : vector<8x64xf32>
      %c0_26 = arith.constant 0 : index
      %c0_27 = arith.constant 0 : index
      %46 = vector.load %arg6[%c0_26, %c0_27] : memref<64x32xf32, #tpu.memory_space<vmem>>, vector<64x32xf32>
      %cst_28 = arith.constant dense<0.000000e+00> : vector<8x32xf32>
      %47 = tpu.matmul %45, %46, %cst_28 {dimension_numbers = #tpu.dot_dimension_numbers<[1], [0], [0], [1], [0, 0, 1, 1], [], []>} : vector<8x64xf32>, vector<64x32xf32>, vector<8x32xf32> -> vector<8x32xf32>
      %c0_29 = arith.constant 0 : index
      %c0_30 = arith.constant 0 : index
      %48 = vector.load %arg7[%c0_29, %c0_30] : memref<1x32xf32, #tpu.memory_space<vmem>>, vector<1x32xf32>
      %49 = vector.broadcast %48 : vector<1x32xf32> to vector<8x32xf32>
      %50 = arith.addf %47, %49 : vector<8x32xf32>
      %c0_31 = arith.constant 0 : index
      %c0_32 = arith.constant 0 : index
      %51 = vector.load %arg8[%c0_31, %c0_32] : memref<1x32xf32, #tpu.memory_space<vmem>>, vector<1x32xf32>
      %c0_33 = arith.constant 0 : index
      %c0_34 = arith.constant 0 : index
      %52 = vector.load %arg9[%c0_33, %c0_34] : memref<1x32xf32, #tpu.memory_space<vmem>>, vector<1x32xf32>
      %cst_35 = arith.constant dense<0.000000e+00> : vector<32xf32>
      %53 = vector.multi_reduction <add>, %50, %cst_35 [0] : vector<8x32xf32> to vector<32xf32>
      %54 = vector.shape_cast %53 : vector<32xf32> to vector<1x32xf32>
      %cst_36 = arith.constant 8.000000e+00 : f32
      %55 = vector.broadcast %cst_36 : f32 to vector<1x32xf32>
      %56 = arith.divf %54, %55 : vector<1x32xf32>
      %57 = arith.mulf %50, %50 : vector<8x32xf32>
      %cst_37 = arith.constant dense<0.000000e+00> : vector<32xf32>
      %58 = vector.multi_reduction <add>, %57, %cst_37 [0] : vector<8x32xf32> to vector<32xf32>
      %59 = vector.shape_cast %58 : vector<32xf32> to vector<1x32xf32>
      %cst_38 = arith.constant 8.000000e+00 : f32
      %60 = vector.broadcast %cst_38 : f32 to vector<1x32xf32>
      %61 = arith.divf %59, %60 : vector<1x32xf32>
      %62 = arith.mulf %56, %56 : vector<1x32xf32>
      %63 = arith.subf %61, %62 : vector<1x32xf32>
      %cst_39 = arith.constant 0.000000e+00 : f32
      %64 = vector.broadcast %cst_39 : f32 to vector<1x32xf32>
      %65 = arith.maximumf %63, %64 : vector<1x32xf32>
      %66 = vector.broadcast %56 : vector<1x32xf32> to vector<8x32xf32>
      %67 = arith.subf %50, %66 : vector<8x32xf32>
      %cst_40 = arith.constant 9.99999974E-6 : f32
      %68 = vector.broadcast %cst_40 : f32 to vector<1x32xf32>
      %69 = arith.addf %65, %68 : vector<1x32xf32>
      %70 = math.rsqrt %69 : vector<1x32xf32>
      %71 = vector.broadcast %70 : vector<1x32xf32> to vector<8x32xf32>
      %72 = arith.mulf %67, %71 : vector<8x32xf32>
      %73 = vector.broadcast %51 : vector<1x32xf32> to vector<8x32xf32>
      %74 = arith.mulf %72, %73 : vector<8x32xf32>
      %75 = vector.broadcast %52 : vector<1x32xf32> to vector<8x32xf32>
      %76 = arith.addf %74, %75 : vector<8x32xf32>
      %cst_41 = arith.constant 0.000000e+00 : f32
      %77 = vector.broadcast %cst_41 : f32 to vector<8x32xf32>
      %78 = arith.maximumf %76, %77 : vector<8x32xf32>
      %c0_42 = arith.constant 0 : index
      %c0_43 = arith.constant 0 : index
      %79 = vector.load %arg10[%c0_42, %c0_43] : memref<32x16xf32, #tpu.memory_space<vmem>>, vector<32x16xf32>
      %cst_44 = arith.constant dense<0.000000e+00> : vector<8x16xf32>
      %80 = tpu.matmul %78, %79, %cst_44 {dimension_numbers = #tpu.dot_dimension_numbers<[1], [0], [0], [1], [0, 0, 1, 1], [], []>} : vector<8x32xf32>, vector<32x16xf32>, vector<8x16xf32> -> vector<8x16xf32>
      %c0_45 = arith.constant 0 : index
      %c0_46 = arith.constant 0 : index
      %81 = vector.load %arg11[%c0_45, %c0_46] : memref<1x16xf32, #tpu.memory_space<vmem>>, vector<1x16xf32>
      %82 = vector.broadcast %81 : vector<1x16xf32> to vector<8x16xf32>
      %83 = arith.addf %80, %82 : vector<8x16xf32>
      %c0_47 = arith.constant 0 : index
      %c0_48 = arith.constant 0 : index
      %84 = vector.load %arg12[%c0_47, %c0_48] : memref<1x16xf32, #tpu.memory_space<vmem>>, vector<1x16xf32>
      %c0_49 = arith.constant 0 : index
      %c0_50 = arith.constant 0 : index
      %85 = vector.load %arg13[%c0_49, %c0_50] : memref<1x16xf32, #tpu.memory_space<vmem>>, vector<1x16xf32>
      %cst_51 = arith.constant dense<0.000000e+00> : vector<16xf32>
      %86 = vector.multi_reduction <add>, %83, %cst_51 [0] : vector<8x16xf32> to vector<16xf32>
      %87 = vector.shape_cast %86 : vector<16xf32> to vector<1x16xf32>
      %cst_52 = arith.constant 8.000000e+00 : f32
      %88 = vector.broadcast %cst_52 : f32 to vector<1x16xf32>
      %89 = arith.divf %87, %88 : vector<1x16xf32>
      %90 = arith.mulf %83, %83 : vector<8x16xf32>
      %cst_53 = arith.constant dense<0.000000e+00> : vector<16xf32>
      %91 = vector.multi_reduction <add>, %90, %cst_53 [0] : vector<8x16xf32> to vector<16xf32>
      %92 = vector.shape_cast %91 : vector<16xf32> to vector<1x16xf32>
      %cst_54 = arith.constant 8.000000e+00 : f32
      %93 = vector.broadcast %cst_54 : f32 to vector<1x16xf32>
      %94 = arith.divf %92, %93 : vector<1x16xf32>
      %95 = arith.mulf %89, %89 : vector<1x16xf32>
      %96 = arith.subf %94, %95 : vector<1x16xf32>
      %cst_55 = arith.constant 0.000000e+00 : f32
      %97 = vector.broadcast %cst_55 : f32 to vector<1x16xf32>
      %98 = arith.maximumf %96, %97 : vector<1x16xf32>
      %99 = vector.broadcast %89 : vector<1x16xf32> to vector<8x16xf32>
      %100 = arith.subf %83, %99 : vector<8x16xf32>
      %cst_56 = arith.constant 9.99999974E-6 : f32
      %101 = vector.broadcast %cst_56 : f32 to vector<1x16xf32>
      %102 = arith.addf %98, %101 : vector<1x16xf32>
      %103 = math.rsqrt %102 : vector<1x16xf32>
      %104 = vector.broadcast %103 : vector<1x16xf32> to vector<8x16xf32>
      %105 = arith.mulf %100, %104 : vector<8x16xf32>
      %106 = vector.broadcast %84 : vector<1x16xf32> to vector<8x16xf32>
      %107 = arith.mulf %105, %106 : vector<8x16xf32>
      %108 = vector.broadcast %85 : vector<1x16xf32> to vector<8x16xf32>
      %109 = arith.addf %107, %108 : vector<8x16xf32>
      %cst_57 = arith.constant 0.000000e+00 : f32
      %110 = vector.broadcast %cst_57 : f32 to vector<8x16xf32>
      %111 = arith.maximumf %109, %110 : vector<8x16xf32>
      %c0_58 = arith.constant 0 : index
      %c0_59 = arith.constant 0 : index
      %112 = vector.load %arg14[%c0_58, %c0_59] : memref<16x8xf32, #tpu.memory_space<vmem>>, vector<16x8xf32>
      %cst_60 = arith.constant dense<0.000000e+00> : vector<8x8xf32>
      %113 = tpu.matmul %111, %112, %cst_60 {dimension_numbers = #tpu.dot_dimension_numbers<[1], [0], [0], [1], [0, 0, 1, 1], [], []>} : vector<8x16xf32>, vector<16x8xf32>, vector<8x8xf32> -> vector<8x8xf32>
      %c0_61 = arith.constant 0 : index
      %c0_62 = arith.constant 0 : index
      %114 = vector.load %arg15[%c0_61, %c0_62] : memref<1x8xf32, #tpu.memory_space<vmem>>, vector<1x8xf32>
      %115 = vector.broadcast %114 : vector<1x8xf32> to vector<8x8xf32>
      %116 = arith.addf %113, %115 : vector<8x8xf32>
      %117 = vector.extract_strided_slice %116 {offsets = [0, 0], sizes = [8, 4], strides = [1, 1]} : vector<8x8xf32> to vector<8x4xf32>
      %118 = arith.mulf %117, %117 : vector<8x4xf32>
      %cst_63 = arith.constant dense<0.000000e+00> : vector<8xf32>
      %119 = vector.multi_reduction <add>, %118, %cst_63 [1] : vector<8x4xf32> to vector<8xf32>
      %120 = vector.shape_cast %119 : vector<8xf32> to vector<8x1xf32>
      %121 = math.rsqrt %120 : vector<8x1xf32>
      %122 = tpu.iota {dimensions = array<i32: 1>} : vector<8x8xi32>
      %c4_i32 = arith.constant 4 : i32
      %123 = vector.broadcast %c4_i32 : i32 to vector<8x8xi32>
      %124 = arith.cmpi slt, %122, %123 : vector<8x8xi32>
      %125 = vector.broadcast %121 : vector<8x1xf32> to vector<8x8xf32>
      %126 = arith.mulf %116, %125 : vector<8x8xf32>
      %127 = arith.select %124, %126, %116 : vector<8x8xi1>, vector<8x8xf32>
      %c0_64 = arith.constant 0 : index
      %c0_65 = arith.constant 0 : index
      %128 = vector.load %arg16[%c0_64, %c0_65] : memref<8x8xf32, #tpu.memory_space<vmem>>, vector<8x8xf32>
      tpu.vector_store %arg16[%c0_64, %c0_65], %127 {strides = array<i32>} : memref<8x8xf32, #tpu.memory_space<vmem>>, vector<8x8xf32>,
    } else {
    }
    return
  }
  func.func @transform_0(%arg0: i32) -> (i32, i32, i32) {
    %c0_i32 = arith.constant 0 : i32
    %c0_i32_0 = arith.constant 0 : i32
    %c0_i32_1 = arith.constant 0 : i32
    return %c0_i32, %arg0, %c0_i32_0 : i32, i32, i32
  }
  func.func @transform_1(%arg0: i32) -> (i32, i32) {
    %c0_i32 = arith.constant 0 : i32
    %c0_i32_0 = arith.constant 0 : i32
    %c0_i32_1 = arith.constant 0 : i32
    return %c0_i32, %c0_i32_0 : i32, i32
  }
  func.func @transform_2(%arg0: i32) -> (i32, i32) {
    %c0_i32 = arith.constant 0 : i32
    %c0_i32_0 = arith.constant 0 : i32
    %c0_i32_1 = arith.constant 0 : i32
    return %c0_i32, %c0_i32_0 : i32, i32
  }
  func.func @transform_3(%arg0: i32) -> (i32, i32) {
    %c0_i32 = arith.constant 0 : i32
    %c0_i32_0 = arith.constant 0 : i32
    %c0_i32_1 = arith.constant 0 : i32
    return %c0_i32, %c0_i32_0 : i32, i32
  }
  func.func @transform_4(%arg0: i32) -> (i32, i32) {
    %c0_i32 = arith.constant 0 : i32
    %c0_i32_0 = arith.constant 0 : i32
    %c0_i32_1 = arith.constant 0 : i32
    return %c0_i32, %c0_i32_0 : i32, i32
  }
  func.func @transform_5(%arg0: i32) -> (i32, i32) {
    %c0_i32 = arith.constant 0 : i32
    %c0_i32_0 = arith.constant 0 : i32
    %c0_i32_1 = arith.constant 0 : i32
    return %c0_i32, %c0_i32_0 : i32, i32
  }
  func.func @transform_6(%arg0: i32) -> (i32, i32) {
    %c0_i32 = arith.constant 0 : i32
    %c0_i32_0 = arith.constant 0 : i32
    %c0_i32_1 = arith.constant 0 : i32
    return %c0_i32, %c0_i32_0 : i32, i32
  }
  func.func @transform_7(%arg0: i32) -> (i32, i32) {
    %c0_i32 = arith.constant 0 : i32
    %c0_i32_0 = arith.constant 0 : i32
    %c0_i32_1 = arith.constant 0 : i32
    return %c0_i32, %c0_i32_0 : i32, i32
  }
  func.func @transform_8(%arg0: i32) -> (i32, i32) {
    %c0_i32 = arith.constant 0 : i32
    %c0_i32_0 = arith.constant 0 : i32
    %c0_i32_1 = arith.constant 0 : i32
    return %c0_i32, %c0_i32_0 : i32, i32
  }
  func.func @transform_9(%arg0: i32) -> (i32, i32) {
    %c0_i32 = arith.constant 0 : i32
    %c0_i32_0 = arith.constant 0 : i32
    %c0_i32_1 = arith.constant 0 : i32
    return %c0_i32, %c0_i32_0 : i32, i32
  }
  func.func @transform_10(%arg0: i32) -> (i32, i32) {
    %c0_i32 = arith.constant 0 : i32
    %c0_i32_0 = arith.constant 0 : i32
    %c0_i32_1 = arith.constant 0 : i32
    return %c0_i32, %c0_i32_0 : i32, i32
  }
  func.func @transform_11(%arg0: i32) -> (i32, i32) {
    %c0_i32 = arith.constant 0 : i32
    %c0_i32_0 = arith.constant 0 : i32
    %c0_i32_1 = arith.constant 0 : i32
    return %c0_i32, %c0_i32_0 : i32, i32
  }
  func.func @transform_12(%arg0: i32) -> (i32, i32) {
    %c0_i32 = arith.constant 0 : i32
    %c0_i32_0 = arith.constant 0 : i32
    %c0_i32_1 = arith.constant 0 : i32
    return %c0_i32, %c0_i32_0 : i32, i32
  }
  func.func @transform_13(%arg0: i32) -> (i32, i32) {
    %c0_i32 = arith.constant 0 : i32
    %c0_i32_0 = arith.constant 0 : i32
    %c0_i32_1 = arith.constant 0 : i32
    return %c0_i32, %c0_i32_0 : i32, i32
  }
  func.func @transform_14(%arg0: i32) -> (i32, i32) {
    %c0_i32 = arith.constant 0 : i32
    %c0_i32_0 = arith.constant 0 : i32
    %c0_i32_1 = arith.constant 0 : i32
    return %c0_i32, %c0_i32_0 : i32, i32
  }
  func.func @transform_15(%arg0: i32) -> (i32, i32) {
    %c0_i32 = arith.constant 0 : i32
    %c0_i32_0 = arith.constant 0 : i32
    %c0_i32_1 = arith.constant 0 : i32
    return %c0_i32, %c0_i32_0 : i32, i32
  }
}

</mosaic_0001>

<llo_original>
// kernel: tpu_custom_call.1
$region0: #{tpu_custom_call.1}
  #allocation0 [shape = 'u32[]', space=smem, size = 0x4, offset = 0x4, fixed_abs, tag = 'smem constant byte address 0x4 - core index']
  #allocation1 [shape = 'u32[144,128]{1,0:T(1,128)}', space=vmem, size = 0x12000, scoped, tag = 'internal scratch']
  #allocation2 [shape = 'f32[8,128]{1,0:T(8,128)}', space=vmem, size = 0x1000, scoped, tag = 'scratch operand']
  #allocation7 [shape = 's32[]', space=sflag, size = 0x4, offset = 0, fixed_abs, tag = 'sflag constant byte address 0x0 - dummy sync flag']
  %s0 = inlined_call_operand.hbm [shape: bf16[8,256,128], index: 0, kind: input, shape index: {}]
  %s1 = inlined_call_operand.vmem [shape: f32[128,64], index: 1, kind: input, shape index: {}]
  %s2 = inlined_call_operand.vmem [shape: f32[1,64], index: 2, kind: input, shape index: {}]
  %s3 = inlined_call_operand.vmem [shape: f32[1,64], index: 3, kind: input, shape index: {}]
  %s4 = inlined_call_operand.vmem [shape: f32[1,64], index: 4, kind: input, shape index: {}]
  %s5 = inlined_call_operand.vmem [shape: f32[64,32], index: 5, kind: input, shape index: {}]
  %s6 = inlined_call_operand.vmem [shape: f32[1,32], index: 6, kind: input, shape index: {}]
  %s7 = inlined_call_operand.vmem [shape: f32[1,32], index: 7, kind: input, shape index: {}]
  %s8 = inlined_call_operand.vmem [shape: f32[1,32], index: 8, kind: input, shape index: {}]
  %s9 = inlined_call_operand.vmem [shape: f32[32,16], index: 9, kind: input, shape index: {}]
  %s10 = inlined_call_operand.vmem [shape: f32[1,16], index: 10, kind: input, shape index: {}]
  %s11 = inlined_call_operand.vmem [shape: f32[1,16], index: 11, kind: input, shape index: {}]
  %s12 = inlined_call_operand.vmem [shape: f32[1,16], index: 12, kind: input, shape index: {}]
  %s13 = inlined_call_operand.vmem [shape: f32[16,8], index: 13, kind: input, shape index: {}]
  %s14 = inlined_call_operand.vmem [shape: f32[1,8], index: 14, kind: input, shape index: {}]
  %s15 = inlined_call_operand.hbm [shape: f32[8,8], index: 15, kind: output, shape index: {}]
  %s16 = sld [smem:[#allocation0]]
  $region105: #{tpu_custom_call.1} parent=0
    _
  %s18 = ssub.s32 1, %s16
  %s19 = scalar_select 0, %s18, %s16
  $region1: #{tpu_custom_call.1} parent=0
    #allocation3 [shape = 'u8[524288]{0}', space=vmem, size = 0x80000, scoped, tag = 'input window, operand 0']
    #allocation4 [shape = 's32[2]{0}', space=sflag, size = 0x8, scoped, tag = 'scoped memory for tpu_custom_call.1']
    #allocation5 [shape = 's32[2]{0}', space=sflag, size = 0x8, scoped, tag = 'scoped memory for tpu_custom_call.1']
    #allocation6 [shape = 'u8[4096]{0}', space=vmem, size = 0x1000, scoped, tag = 'output window, operand 0, single buffered']
    %20 = vsyncpa [#allocation4], 0
    %s21 = scalar_lea.sflag [#allocation4], 1
    %22 = vsyncpa %s21, 0
    %23 = vsyncpa [#allocation5], 0
    loop: start=0, step=1, limit=4
    $region2: #{tpu_custom_call.1} parent=1 // loop_pre_header
      _
    $region3: #{tpu_custom_call.1} parent=1 // loop_header
      %s25 = sphi 0, %s29
      %p26 = scmp.ge.s32.totalorder %s25, 4
      %s35 = sphi 0, %s37
      %s38 = sphi 0, %s35
      %s39 = sphi 0, %s38
      %s55 = sphi 0, %s39
      %s59 = sphi 0, %s59
      %s61 = sphi 0, %s59
      %s62 = sphi 0, %s61
      %s76 = sphi 0, %s62
      %s80 = sphi 0, %s80
      %s82 = sphi 0, %s80
      %s83 = sphi 0, %s82
      %s97 = sphi 0, %s83
      %s101 = sphi 0, %s101
      %s103 = sphi 0, %s101
      %s104 = sphi 0, %s103
      %s118 = sphi 0, %s104
      %s122 = sphi 0, %s122
      %s124 = sphi 0, %s122
      %s125 = sphi 0, %s124
      %s139 = sphi 0, %s125
      %s143 = sphi 0, %s143
      %s145 = sphi 0, %s143
      %s146 = sphi 0, %s145
      %s160 = sphi 0, %s146
      %s164 = sphi 0, %s164
      %s166 = sphi 0, %s164
      %s167 = sphi 0, %s166
      %s181 = sphi 0, %s167
      %s185 = sphi 0, %s185
      %s187 = sphi 0, %s185
      %s188 = sphi 0, %s187
      %s202 = sphi 0, %s188
      %s206 = sphi 0, %s206
      %s208 = sphi 0, %s206
      %s209 = sphi 0, %s208
      %s223 = sphi 0, %s209
      %s227 = sphi 0, %s227
      %s229 = sphi 0, %s227
      %s230 = sphi 0, %s229
      %s244 = sphi 0, %s230
      %s248 = sphi 0, %s248
      %s250 = sphi 0, %s248
      %s251 = sphi 0, %s250
      %s265 = sphi 0, %s251
      %s269 = sphi 0, %s269
      %s271 = sphi 0, %s269
      %s272 = sphi 0, %s271
      %s286 = sphi 0, %s272
      %s290 = sphi 0, %s290
      %s292 = sphi 0, %s290
      %s293 = sphi 0, %s292
      %s307 = sphi 0, %s293
      %s311 = sphi 0, %s311
      %s313 = sphi 0, %s311
      %s314 = sphi 0, %s313
      %s328 = sphi 0, %s314
      %s332 = sphi 0, %s332
      %s334 = sphi 0, %s332
      %s335 = sphi 0, %s334
      %s349 = sphi 0, %s335
      %s353 = sphi 0, %s353
      %s355 = sphi 0, %s353
      %s356 = sphi 0, %s355
      %s370 = sphi 0, %s356
    $region4: #{tpu_custom_call.1} parent=1 // loop_header_branch
      %28 = sbr.rel (%p26) target = $region8
    $region5: #{tpu_custom_call.1} parent=1 // loop_body
      %s30 = ssub.s32 %s25, 1
      %s31 = ssub.s32 %s25, 2
      %s32 = sadd.s32 %s25, 1
      %s33 = ssub.s32 %s25, %s32
      %p34 = scmp.eq.s32.totalorder %s33, 0
      %s36 = sadd.s32 %s35, 1
      %s37 = scalar_select %p34, %s35, %s36
      %p40 = pneg %p34
      %p41 = scmp.eq.s32.totalorder %s25, 1
      %p42 = por %p40, %p41
      %p43 = scmp.ne.s32.totalorder %s35, %s38
      %p44 = scmp.eq.s32.totalorder %s25, 0
      %p45 = por %p43, %p44
      %p46 = scmp.ne.s32.totalorder %s35, %s38
      %p47 = scmp.eq.s32.totalorder %s30, 1
      %p48 = por %p46, %p47
      %p49 = scmp.ne.s32.totalorder %s38, %s39
      %p50 = scmp.eq.s32.totalorder %s30, 0
      %p51 = por %p49, %p50
      %p52 = scmp.ne.s32.totalorder %s38, %s39
      %p53 = scmp.eq.s32.totalorder %s31, 1
      %p54 = por %p52, %p53
      %p56 = scmp.ne.s32.totalorder %s39, %s55
      %p57 = scmp.eq.s32.totalorder %s31, 0
      %p58 = por %p56, %p57
      %s60 = sadd.s32 %s59, 1
      %p63 = scmp.eq.s32.totalorder %s25, 1
      %p64 = scmp.ne.s32.totalorder %s59, %s61
      %p65 = scmp.eq.s32.totalorder %s25, 0
      %p66 = por %p64, %p65
      %p67 = scmp.ne.s32.totalorder %s59, %s61
      %p68 = scmp.eq.s32.totalorder %s30, 1
      %p69 = por %p67, %p68
      %p70 = scmp.ne.s32.totalorder %s61, %s62
      %p71 = scmp.eq.s32.totalorder %s30, 0
      %p72 = por %p70, %p71
      %p73 = scmp.ne.s32.totalorder %s61, %s62
      %p74 = scmp.eq.s32.totalorder %s31, 1
      %p75 = por %p73, %p74
      %p77 = scmp.ne.s32.totalorder %s62, %s76
      %p78 = scmp.eq.s32.totalorder %s31, 0
      %p79 = por %p77, %p78
      %s81 = sadd.s32 %s80, 1
      %p84 = scmp.eq.s32.totalorder %s25, 1
      %p85 = scmp.ne.s32.totalorder %s80, %s82
      %p86 = scmp.eq.s32.totalorder %s25, 0
      %p87 = por %p85, %p86
      %p88 = scmp.ne.s32.totalorder %s80, %s82
      %p89 = scmp.eq.s32.totalorder %s30, 1
      %p90 = por %p88, %p89
      %p91 = scmp.ne.s32.totalorder %s82, %s83
      %p92 = scmp.eq.s32.totalorder %s30, 0
      %p93 = por %p91, %p92
      %p94 = scmp.ne.s32.totalorder %s82, %s83
      %p95 = scmp.eq.s32.totalorder %s31, 1
      %p96 = por %p94, %p95
      %p98 = scmp.ne.s32.totalorder %s83, %s97
      %p99 = scmp.eq.s32.totalorder %s31, 0
      %p100 = por %p98, %p99
      %s102 = sadd.s32 %s101, 1
      %p105 = scmp.eq.s32.totalorder %s25, 1
      %p106 = scmp.ne.s32.totalorder %s101, %s103
      %p107 = scmp.eq.s32.totalorder %s25, 0
      %p108 = por %p106, %p107
      %p109 = scmp.ne.s32.totalorder %s101, %s103
      %p110 = scmp.eq.s32.totalorder %s30, 1
      %p111 = por %p109, %p110
      %p112 = scmp.ne.s32.totalorder %s103, %s104
      %p113 = scmp.eq.s32.totalorder %s30, 0
      %p114 = por %p112, %p113
      %p115 = scmp.ne.s32.totalorder %s103, %s104
      %p116 = scmp.eq.s32.totalorder %s31, 1
      %p117 = por %p115, %p116
      %p119 = scmp.ne.s32.totalorder %s104, %s118
      %p120 = scmp.eq.s32.totalorder %s31, 0
      %p121 = por %p119, %p120
      %s123 = sadd.s32 %s122, 1
      %p126 = scmp.eq.s32.totalorder %s25, 1
      %p127 = scmp.ne.s32.totalorder %s122, %s124
      %p128 = scmp.eq.s32.totalorder %s25, 0
      %p129 = por %p127, %p128
      %p130 = scmp.ne.s32.totalorder %s122, %s124
      %p131 = scmp.eq.s32.totalorder %s30, 1
      %p132 = por %p130, %p131
      %p133 = scmp.ne.s32.totalorder %s124, %s125
      %p134 = scmp.eq.s32.totalorder %s30, 0
      %p135 = por %p133, %p134
      %p136 = scmp.ne.s32.totalorder %s124, %s125
      %p137 = scmp.eq.s32.totalorder %s31, 1
      %p138 = por %p136, %p137
      %p140 = scmp.ne.s32.totalorder %s125, %s139
      %p141 = scmp.eq.s32.totalorder %s31, 0
      %p142 = por %p140, %p141
      %s144 = sadd.s32 %s143, 1
      %p147 = scmp.eq.s32.totalorder %s25, 1
      %p148 = scmp.ne.s32.totalorder %s143, %s145
      %p149 = scmp.eq.s32.totalorder %s25, 0
      %p150 = por %p148, %p149
      %p151 = scmp.ne.s32.totalorder %s143, %s145
      %p152 = scmp.eq.s32.totalorder %s30, 1
      %p153 = por %p151, %p152
      %p154 = scmp.ne.s32.totalorder %s145, %s146
      %p155 = scmp.eq.s32.totalorder %s30, 0
      %p156 = por %p154, %p155
      %p157 = scmp.ne.s32.totalorder %s145, %s146
      %p158 = scmp.eq.s32.totalorder %s31, 1
      %p159 = por %p157, %p158
      %p161 = scmp.ne.s32.totalorder %s146, %s160
      %p162 = scmp.eq.s32.totalorder %s31, 0
      %p163 = por %p161, %p162
      %s165 = sadd.s32 %s164, 1
      %p168 = scmp.eq.s32.totalorder %s25, 1
      %p169 = scmp.ne.s32.totalorder %s164, %s166
      %p170 = scmp.eq.s32.totalorder %s25, 0
      %p171 = por %p169, %p170
      %p172 = scmp.ne.s32.totalorder %s164, %s166
      %p173 = scmp.eq.s32.totalorder %s30, 1
      %p174 = por %p172, %p173
      %p175 = scmp.ne.s32.totalorder %s166, %s167
      %p176 = scmp.eq.s32.totalorder %s30, 0
      %p177 = por %p175, %p176
      %p178 = scmp.ne.s32.totalorder %s166, %s167
      %p179 = scmp.eq.s32.totalorder %s31, 1
      %p180 = por %p178, %p179
      %p182 = scmp.ne.s32.totalorder %s167, %s181
      %p183 = scmp.eq.s32.totalorder %s31, 0
      %p184 = por %p182, %p183
      %s186 = sadd.s32 %s185, 1
      %p189 = scmp.eq.s32.totalorder %s25, 1
      %p190 = scmp.ne.s32.totalorder %s185, %s187
      %p191 = scmp.eq.s32.totalorder %s25, 0
      %p192 = por %p190, %p191
      %p193 = scmp.ne.s32.totalorder %s185, %s187
      %p194 = scmp.eq.s32.totalorder %s30, 1
      %p195 = por %p193, %p194
      %p196 = scmp.ne.s32.totalorder %s187, %s188
      %p197 = scmp.eq.s32.totalorder %s30, 0
      %p198 = por %p196, %p197
      %p199 = scmp.ne.s32.totalorder %s187, %s188
      %p200 = scmp.eq.s32.totalorder %s31, 1
      %p201 = por %p199, %p200
      %p203 = scmp.ne.s32.totalorder %s188, %s202
      %p204 = scmp.eq.s32.totalorder %s31, 0
      %p205 = por %p203, %p204
      %s207 = sadd.s32 %s206, 1
      %p210 = scmp.eq.s32.totalorder %s25, 1
      %p211 = scmp.ne.s32.totalorder %s206, %s208
      %p212 = scmp.eq.s32.totalorder %s25, 0
      %p213 = por %p211, %p212
      %p214 = scmp.ne.s32.totalorder %s206, %s208
      %p215 = scmp.eq.s32.totalorder %s30, 1
      %p216 = por %p214, %p215
      %p217 = scmp.ne.s32.totalorder %s208, %s209
      %p218 = scmp.eq.s32.totalorder %s30, 0
      %p219 = por %p217, %p218
      %p220 = scmp.ne.s32.totalorder %s208, %s209
      %p221 = scmp.eq.s32.totalorder %s31, 1
      %p222 = por %p220, %p221
      %p224 = scmp.ne.s32.totalorder %s209, %s223
      %p225 = scmp.eq.s32.totalorder %s31, 0
      %p226 = por %p224, %p225
      %s228 = sadd.s32 %s227, 1
      %p231 = scmp.eq.s32.totalorder %s25, 1
      %p232 = scmp.ne.s32.totalorder %s227, %s229
      %p233 = scmp.eq.s32.totalorder %s25, 0
      %p234 = por %p232, %p233
      %p235 = scmp.ne.s32.totalorder %s227, %s229
      %p236 = scmp.eq.s32.totalorder %s30, 1
      %p237 = por %p235, %p236
      %p238 = scmp.ne.s32.totalorder %s229, %s230
      %p239 = scmp.eq.s32.totalorder %s30, 0
      %p240 = por %p238, %p239
      %p241 = scmp.ne.s32.totalorder %s229, %s230
      %p242 = scmp.eq.s32.totalorder %s31, 1
      %p243 = por %p241, %p242
      %p245 = scmp.ne.s32.totalorder %s230, %s244
      %p246 = scmp.eq.s32.totalorder %s31, 0
      %p247 = por %p245, %p246
      %s249 = sadd.s32 %s248, 1
      %p252 = scmp.eq.s32.totalorder %s25, 1
      %p253 = scmp.ne.s32.totalorder %s248, %s250
      %p254 = scmp.eq.s32.totalorder %s25, 0
      %p255 = por %p253, %p254
      %p256 = scmp.ne.s32.totalorder %s248, %s250
      %p257 = scmp.eq.s32.totalorder %s30, 1
      %p258 = por %p256, %p257
      %p259 = scmp.ne.s32.totalorder %s250, %s251
      %p260 = scmp.eq.s32.totalorder %s30, 0
      %p261 = por %p259, %p260
      %p262 = scmp.ne.s32.totalorder %s250, %s251
      %p263 = scmp.eq.s32.totalorder %s31, 1
      %p264 = por %p262, %p263
      %p266 = scmp.ne.s32.totalorder %s251, %s265
      %p267 = scmp.eq.s32.totalorder %s31, 0
      %p268 = por %p266, %p267
      %s270 = sadd.s32 %s269, 1
      %p273 = scmp.eq.s32.totalorder %s25, 1
      %p274 = scmp.ne.s32.totalorder %s269, %s271
      %p275 = scmp.eq.s32.totalorder %s25, 0
      %p276 = por %p274, %p275
      %p277 = scmp.ne.s32.totalorder %s269, %s271
      %p278 = scmp.eq.s32.totalorder %s30, 1
      %p279 = por %p277, %p278
      %p280 = scmp.ne.s32.totalorder %s271, %s272
      %p281 = scmp.eq.s32.totalorder %s30, 0
      %p282 = por %p280, %p281
      %p283 = scmp.ne.s32.totalorder %s271, %s272
      %p284 = scmp.eq.s32.totalorder %s31, 1
      %p285 = por %p283, %p284
      %p287 = scmp.ne.s32.totalorder %s272, %s286
      %p288 = scmp.eq.s32.totalorder %s31, 0
      %p289 = por %p287, %p288
      %s291 = sadd.s32 %s290, 1
      %p294 = scmp.eq.s32.totalorder %s25, 1
      %p295 = scmp.ne.s32.totalorder %s290, %s292
      %p296 = scmp.eq.s32.totalorder %s25, 0
      %p297 = por %p295, %p296
      %p298 = scmp.ne.s32.totalorder %s290, %s292
      %p299 = scmp.eq.s32.totalorder %s30, 1
      %p300 = por %p298, %p299
      %p301 = scmp.ne.s32.totalorder %s292, %s293
      %p302 = scmp.eq.s32.totalorder %s30, 0
      %p303 = por %p301, %p302
      %p304 = scmp.ne.s32.totalorder %s292, %s293
      %p305 = scmp.eq.s32.totalorder %s31, 1
      %p306 = por %p304, %p305
      %p308 = scmp.ne.s32.totalorder %s293, %s307
      %p309 = scmp.eq.s32.totalorder %s31, 0
      %p310 = por %p308, %p309
      %s312 = sadd.s32 %s311, 1
      %p315 = scmp.eq.s32.totalorder %s25, 1
      %p316 = scmp.ne.s32.totalorder %s311, %s313
      %p317 = scmp.eq.s32.totalorder %s25, 0
      %p318 = por %p316, %p317
      %p319 = scmp.ne.s32.totalorder %s311, %s313
      %p320 = scmp.eq.s32.totalorder %s30, 1
      %p321 = por %p319, %p320
      %p322 = scmp.ne.s32.totalorder %s313, %s314
      %p323 = scmp.eq.s32.totalorder %s30, 0
      %p324 = por %p322, %p323
      %p325 = scmp.ne.s32.totalorder %s313, %s314
      %p326 = scmp.eq.s32.totalorder %s31, 1
      %p327 = por %p325, %p326
      %p329 = scmp.ne.s32.totalorder %s314, %s328
      %p330 = scmp.eq.s32.totalorder %s31, 0
      %p331 = por %p329, %p330
      %s333 = sadd.s32 %s332, 1
      %p336 = scmp.eq.s32.totalorder %s25, 1
      %p337 = scmp.ne.s32.totalorder %s332, %s334
      %p338 = scmp.eq.s32.totalorder %s25, 0
      %p339 = por %p337, %p338
      %p340 = scmp.ne.s32.totalorder %s332, %s334
      %p341 = scmp.eq.s32.totalorder %s30, 1
      %p342 = por %p340, %p341
      %p343 = scmp.ne.s32.totalorder %s334, %s335
      %p344 = scmp.eq.s32.totalorder %s30, 0
      %p345 = por %p343, %p344
      %p346 = scmp.ne.s32.totalorder %s334, %s335
      %p347 = scmp.eq.s32.totalorder %s31, 1
      %p348 = por %p346, %p347
      %p350 = scmp.ne.s32.totalorder %s335, %s349
      %p351 = scmp.eq.s32.totalorder %s31, 0
      %p352 = por %p350, %p351
      %s354 = sadd.s32 %s353, 1
      %p357 = scmp.eq.s32.totalorder %s25, 1
      %p358 = scmp.ne.s32.totalorder %s353, %s355
      %p359 = scmp.eq.s32.totalorder %s25, 0
      %p360 = por %p358, %p359
      %p361 = scmp.ne.s32.totalorder %s353, %s355
      %p362 = scmp.eq.s32.totalorder %s30, 1
      %p363 = por %p361, %p362
      %p364 = scmp.ne.s32.totalorder %s355, %s356
      %p365 = scmp.eq.s32.totalorder %s30, 0
      %p366 = por %p364, %p365
      %p367 = scmp.ne.s32.totalorder %s355, %s356
      %p368 = scmp.eq.s32.totalorder %s31, 1
      %p369 = por %p367, %p368
      %p371 = scmp.ne.s32.totalorder %s356, %s370
      %p372 = scmp.eq.s32.totalorder %s31, 0
      %p373 = por %p371, %p372
      %p374 = scmp.le.s32.totalorder 1, %s25
      %p375 = scmp.lt.s32.totalorder %s25, 3
      %p376 = pnand %p374, %p375
      %p377 = pneg %p376
      // Predicated region
      $region9: #{tpu_custom_call.1} parent=5 // pred_check
        _
      $region10: #{tpu_custom_call.1} parent=5 // pred_check_branch
        %379 = sbr.rel (%p376) target = $region12
      $region11: #{tpu_custom_call.1} parent=5 // pred_region
        %s380 = ssub.s32 %s25, 1
        // Predicated region
        $region13: #{tpu_custom_call.1} parent=11 // pred_check
          %p381 = pneg %p72
        $region14: #{tpu_custom_call.1} parent=11 // pred_check_branch
          %383 = sbr.rel (%p381) target = $region16
        $region15: #{tpu_custom_call.1} parent=11 // pred_region
          _
        $region16: #{tpu_custom_call.1} parent=11 // pred_fallthru
          _
        // Predicated region
        $region17: #{tpu_custom_call.1} parent=11 // pred_check
          %p384 = pneg %p93
        $region18: #{tpu_custom_call.1} parent=11 // pred_check_branch
          %386 = sbr.rel (%p384) target = $region20
        $region19: #{tpu_custom_call.1} parent=11 // pred_region
          _
        $region20: #{tpu_custom_call.1} parent=11 // pred_fallthru
          _
        // Predicated region
        $region21: #{tpu_custom_call.1} parent=11 // pred_check
          %p387 = pneg %p114
        $region22: #{tpu_custom_call.1} parent=11 // pred_check_branch
          %389 = sbr.rel (%p387) target = $region24
        $region23: #{tpu_custom_call.1} parent=11 // pred_region
          _
        $region24: #{tpu_custom_call.1} parent=11 // pred_fallthru
          _
        // Predicated region
        $region25: #{tpu_custom_call.1} parent=11 // pred_check
          %p390 = pneg %p135
        $region26: #{tpu_custom_call.1} parent=11 // pred_check_branch
          %392 = sbr.rel (%p390) target = $region28
        $region27: #{tpu_custom_call.1} parent=11 // pred_region
          _
        $region28: #{tpu_custom_call.1} parent=11 // pred_fallthru
          _
        // Predicated region
        $region29: #{tpu_custom_call.1} parent=11 // pred_check
          %p393 = pneg %p156
        $region30: #{tpu_custom_call.1} parent=11 // pred_check_branch
          %395 = sbr.rel (%p393) target = $region32
        $region31: #{tpu_custom_call.1} parent=11 // pred_region
          _
        $region32: #{tpu_custom_call.1} parent=11 // pred_fallthru
          _
        // Predicated region
        $region33: #{tpu_custom_call.1} parent=11 // pred_check
          %p396 = pneg %p177
        $region34: #{tpu_custom_call.1} parent=11 // pred_check_branch
          %398 = sbr.rel (%p396) target = $region36
        $region35: #{tpu_custom_call.1} parent=11 // pred_region
          _
        $region36: #{tpu_custom_call.1} parent=11 // pred_fallthru
          _
        // Predicated region
        $region37: #{tpu_custom_call.1} parent=11 // pred_check
          %p399 = pneg %p198
        $region38: #{tpu_custom_call.1} parent=11 // pred_check_branch
          %401 = sbr.rel (%p399) target = $region40
        $region39: #{tpu_custom_call.1} parent=11 // pred_region
          _
        $region40: #{tpu_custom_call.1} parent=11 // pred_fallthru
          _
        // Predicated region
        $region41: #{tpu_custom_call.1} parent=11 // pred_check
          %p402 = pneg %p219
        $region42: #{tpu_custom_call.1} parent=11 // pred_check_branch
          %404 = sbr.rel (%p402) target = $region44
        $region43: #{tpu_custom_call.1} parent=11 // pred_region
          _
        $region44: #{tpu_custom_call.1} parent=11 // pred_fallthru
          _
        // Predicated region
        $region45: #{tpu_custom_call.1} parent=11 // pred_check
          %p405 = pneg %p240
        $region46: #{tpu_custom_call.1} parent=11 // pred_check_branch
          %407 = sbr.rel (%p405) target = $region48
        $region47: #{tpu_custom_call.1} parent=11 // pred_region
          _
        $region48: #{tpu_custom_call.1} parent=11 // pred_fallthru
          _
        // Predicated region
        $region49: #{tpu_custom_call.1} parent=11 // pred_check
          %p408 = pneg %p261
        $region50: #{tpu_custom_call.1} parent=11 // pred_check_branch
          %410 = sbr.rel (%p408) target = $region52
        $region51: #{tpu_custom_call.1} parent=11 // pred_region
          _
        $region52: #{tpu_custom_call.1} parent=11 // pred_fallthru
          _
        // Predicated region
        $region53: #{tpu_custom_call.1} parent=11 // pred_check
          %p411 = pneg %p282
        $region54: #{tpu_custom_call.1} parent=11 // pred_check_branch
          %413 = sbr.rel (%p411) target = $region56
        $region55: #{tpu_custom_call.1} parent=11 // pred_region
          _
        $region56: #{tpu_custom_call.1} parent=11 // pred_fallthru
          _
        // Predicated region
        $region57: #{tpu_custom_call.1} parent=11 // pred_check
          %p414 = pneg %p303
        $region58: #{tpu_custom_call.1} parent=11 // pred_check_branch
          %416 = sbr.rel (%p414) target = $region60
        $region59: #{tpu_custom_call.1} parent=11 // pred_region
          _
        $region60: #{tpu_custom_call.1} parent=11 // pred_fallthru
          _
        // Predicated region
        $region61: #{tpu_custom_call.1} parent=11 // pred_check
          %p417 = pneg %p324
        $region62: #{tpu_custom_call.1} parent=11 // pred_check_branch
          %419 = sbr.rel (%p417) target = $region64
        $region63: #{tpu_custom_call.1} parent=11 // pred_region
          _
        $region64: #{tpu_custom_call.1} parent=11 // pred_fallthru
          _
        // Predicated region
        $region65: #{tpu_custom_call.1} parent=11 // pred_check
          %p420 = pneg %p345
        $region66: #{tpu_custom_call.1} parent=11 // pred_check_branch
          %422 = sbr.rel (%p420) target = $region68
        $region67: #{tpu_custom_call.1} parent=11 // pred_region
          _
        $region68: #{tpu_custom_call.1} parent=11 // pred_fallthru
          _
      $region12: #{tpu_custom_call.1} parent=5 // pred_fallthru
        _
      %p423 = scmp.lt.s32.totalorder %s25, 2
      // Predicated region
      $region69: #{tpu_custom_call.1} parent=5 // pred_check
        %p424 = pneg %p423
      $region70: #{tpu_custom_call.1} parent=5 // pred_check_branch
        %426 = sbr.rel (%p424) target = $region72
      $region71: #{tpu_custom_call.1} parent=5 // pred_region
        // Predicated region
        $region73: #{tpu_custom_call.1} parent=71 // pred_check
          %p427 = pneg %p45
        $region74: #{tpu_custom_call.1} parent=71 // pred_check_branch
          %429 = sbr.rel (%p427) target = $region76
        $region75: #{tpu_custom_call.1} parent=71 // pred_region
          #allocation8 [shape = 'u32[6]{0}', space=smem, size = 0x18, scoped, tag = 'DMA stride descriptor']
          %s430 = sand.u32 %s35, 1
          %s431 = scalar_lea.sflag [#allocation4], %s430
          %s432 = sand.u32 %s35, 1
          %s433 = smul.addr %s432, 512
          %s434 = scalar_lea.vmem [#allocation3], %s433
          %s435 = smul.u32 16, %s25
          %s437 = ssub.s32 8192, 8192
          %438 = vsyncadd %s431, %s437
          %s439 = smul.addr %s435, 64
          %s440 = scalar_lea.hbm %s0, %s439
          %s442 = sshll.u32 1, 14
          %s443 = sxor.u32 4294967295, %s442
          %s445 = sld [smem:[#allocation0]]
          %s446 = sadd.s32 2, %s445
          %s448 = sshll.u32 7, 26
          %s449 = sxor.u32 4294967295, %s448
          %s450 = sand.u32 0, %s449
          %s451 = sshll.u32 %s446, 26
          %s452 = sor.u32 %s450, %s451
          %s453 = sshll.u32 %s434, 4
          %s454 = int_to_ptr.vmem [resolvable:$true] %s453
          %460 = sst [smem:[#allocation8]] 2048
          %s461 = scalar_lea.smem [#allocation8], 1
          %462 = sst [smem:[%s461]] 1024
          %s463 = scalar_lea.smem [#allocation8], 2
          %464 = sst [smem:[%s463]] 16
          %s465 = scalar_lea.smem [#allocation8], 3
          %466 = sst [smem:[%s465]] 64
          %s467 = scalar_lea.smem [#allocation8], 4
          %468 = sst [smem:[%s467]] 64
          %s469 = scalar_lea.smem [#allocation8], 5
          %470 = sst [smem:[%s469]] 4
          %472 = dma.general %s440, 8192, %s454, %s431, [#allocation7], [#allocation8], %s452, 0
        $region76: #{tpu_custom_call.1} parent=71 // pred_fallthru
          _
      $region72: #{tpu_custom_call.1} parent=5 // pred_fallthru
        _
      %p473 = scmp.le.s32.totalorder 1, %s25
      %p474 = scmp.lt.s32.totalorder %s25, 3
      %p475 = pnand %p473, %p474
      %p476 = pneg %p475
      // Predicated region
      $region77: #{tpu_custom_call.1} parent=5 // pred_check
        _
      $region78: #{tpu_custom_call.1} parent=5 // pred_check_branch
        %478 = sbr.rel (%p475) target = $region80
      $region79: #{tpu_custom_call.1} parent=5 // pred_region
        %s479 = ssub.s32 %s25, 1
        %s480 = sand.u32 %s38, 1
        %s481 = scalar_lea.sflag [#allocation4], %s480
        %s482 = sand.u32 %s38, 1
        %s483 = smul.addr %s482, 512
        %s484 = scalar_lea.vmem [#allocation3], %s483
        // Predicated region
        $region81: #{tpu_custom_call.1} parent=79 // pred_check
          %p485 = pneg %p51
        $region82: #{tpu_custom_call.1} parent=79 // pred_check_branch
          %487 = sbr.rel (%p485) target = $region84
        $region83: #{tpu_custom_call.1} parent=79 // pred_region
          %488 = dma.done %s481, 8192
        $region84: #{tpu_custom_call.1} parent=79 // pred_fallthru
          _
        %s489 = sand.u32 %s38, 1
        %s490 = scalar_lea.sflag [#allocation4], %s489
        %s491 = sand.u32 %s38, 1
        %s492 = smul.addr %s491, 512
        %s493 = scalar_lea.vmem [#allocation3], %s492
        %p494 = pneg %p51
        %p495 = pneg %p48
        %p496 = pneg %p72
        %p497 = pneg %p69
        %p498 = pneg %p93
        %p499 = pneg %p90
        %p500 = pneg %p114
        %p501 = pneg %p111
        %p502 = pneg %p135
        %p503 = pneg %p132
        %p504 = pneg %p156
        %p505 = pneg %p153
        %p506 = pneg %p177
        %p507 = pneg %p174
        %p508 = pneg %p198
        %p509 = pneg %p195
        %p510 = pneg %p219
        %p511 = pneg %p216
        %p512 = pneg %p240
        %p513 = pneg %p237
        %p514 = pneg %p261
        %p515 = pneg %p258
        %p516 = pneg %p282
        %p517 = pneg %p279
        %p518 = pneg %p303
        %p519 = pneg %p300
        %p520 = pneg %p324
        %p521 = pneg %p321
        %p522 = pneg %p345
        %p523 = pneg %p342
        %p524 = pneg %p366
        %p525 = pneg %p363
        %s526 = smul.u32 16, %s30
        %p527 = scmp.eq.s32.totalorder %s30, 0
        // Predicated region
        $region85: #{tpu_custom_call.1} parent=79 // pred_check
          %p528 = pneg %p527
        $region86: #{tpu_custom_call.1} parent=79 // pred_check_branch
          %530 = sbr.rel (%p528) target = $region88
        $region87: #{tpu_custom_call.1} parent=79 // pred_region
          %531 = vst [vmem:[#allocation2] sm:$0xff] -inf
        $region88: #{tpu_custom_call.1} parent=79 // pred_fallthru
          _
        %v532 = vld [vmem:[%s484] sm:$0xf]
        %v533 = vld [vmem:[%s484 + $0x4] sm:$0xf]
        %v534 = vld [vmem:[%s484 + $0x8] sm:$0xf]
        %v535 = vld [vmem:[%s484 + $0xc] sm:$0xf]
        %v536 = vld [vmem:[%s484 + $0x10] sm:$0xf]
        %v537 = vld [vmem:[%s484 + $0x14] sm:$0xf]
        %v538 = vld [vmem:[%s484 + $0x18] sm:$0xf]
        %v539 = vld [vmem:[%s484 + $0x1c] sm:$0xf]
        %v540 = vld [vmem:[%s484 + $0x20] sm:$0xf]
        %v541 = vld [vmem:[%s484 + $0x24] sm:$0xf]
        %v542 = vld [vmem:[%s484 + $0x28] sm:$0xf]
        %v543 = vld [vmem:[%s484 + $0x2c] sm:$0xf]
        %v544 = vld [vmem:[%s484 + $0x30] sm:$0xf]
        %v545 = vld [vmem:[%s484 + $0x34] sm:$0xf]
        %v546 = vld [vmem:[%s484 + $0x38] sm:$0xf]
        %v547 = vld [vmem:[%s484 + $0x3c] sm:$0xf]
        %v548 = vld [vmem:[%s484 + $0x40] sm:$0xf]
        %v549 = vld [vmem:[%s484 + $0x44] sm:$0xf]
        %v550 = vld [vmem:[%s484 + $0x48] sm:$0xf]
        %v551 = vld [vmem:[%s484 + $0x4c] sm:$0xf]
        %v552 = vld [vmem:[%s484 + $0x50] sm:$0xf]
        %v553 = vld [vmem:[%s484 + $0x54] sm:$0xf]
        %v554 = vld [vmem:[%s484 + $0x58] sm:$0xf]
        %v555 = vld [vmem:[%s484 + $0x5c] sm:$0xf]
        %v556 = vld [vmem:[%s484 + $0x60] sm:$0xf]
        %v557 = vld [vmem:[%s484 + $0x64] sm:$0xf]
        %v558 = vld [vmem:[%s484 + $0x68] sm:$0xf]
        %v559 = vld [vmem:[%s484 + $0x6c] sm:$0xf]
        %v560 = vld [vmem:[%s484 + $0x70] sm:$0xf]
        %v561 = vld [vmem:[%s484 + $0x74] sm:$0xf]
        %v562 = vld [vmem:[%s484 + $0x78] sm:$0xf]
        %v563 = vld [vmem:[%s484 + $0x7c] sm:$0xf]
        %v564 = vld [vmem:[%s484 + $0x80] sm:$0xf]
        %v565 = vld [vmem:[%s484 + $0x84] sm:$0xf]
        %v566 = vld [vmem:[%s484 + $0x88] sm:$0xf]
        %v567 = vld [vmem:[%s484 + $0x8c] sm:$0xf]
        %v568 = vld [vmem:[%s484 + $0x90] sm:$0xf]
        %v569 = vld [vmem:[%s484 + $0x94] sm:$0xf]
        %v570 = vld [vmem:[%s484 + $0x98] sm:$0xf]
        %v571 = vld [vmem:[%s484 + $0x9c] sm:$0xf]
        %v572 = vld [vmem:[%s484 + $0xa0] sm:$0xf]
        %v573 = vld [vmem:[%s484 + $0xa4] sm:$0xf]
        %v574 = vld [vmem:[%s484 + $0xa8] sm:$0xf]
        %v575 = vld [vmem:[%s484 + $0xac] sm:$0xf]
        %v576 = vld [vmem:[%s484 + $0xb0] sm:$0xf]
        %v577 = vld [vmem:[%s484 + $0xb4] sm:$0xf]
        %v578 = vld [vmem:[%s484 + $0xb8] sm:$0xf]
        %v579 = vld [vmem:[%s484 + $0xbc] sm:$0xf]
        %v580 = vld [vmem:[%s484 + $0xc0] sm:$0xf]
        %v581 = vld [vmem:[%s484 + $0xc4] sm:$0xf]
        %v582 = vld [vmem:[%s484 + $0xc8] sm:$0xf]
        %v583 = vld [vmem:[%s484 + $0xcc] sm:$0xf]
        %v584 = vld [vmem:[%s484 + $0xd0] sm:$0xf]
        %v585 = vld [vmem:[%s484 + $0xd4] sm:$0xf]
        %v586 = vld [vmem:[%s484 + $0xd8] sm:$0xf]
        %v587 = vld [vmem:[%s484 + $0xdc] sm:$0xf]
        %v588 = vld [vmem:[%s484 + $0xe0] sm:$0xf]
        %v589 = vld [vmem:[%s484 + $0xe4] sm:$0xf]
        %v590 = vld [vmem:[%s484 + $0xe8] sm:$0xf]
        %v591 = vld [vmem:[%s484 + $0xec] sm:$0xf]
        %v592 = vld [vmem:[%s484 + $0xf0] sm:$0xf]
        %v593 = vld [vmem:[%s484 + $0xf4] sm:$0xf]
        %v594 = vld [vmem:[%s484 + $0xf8] sm:$0xf]
        %v595 = vld [vmem:[%s484 + $0xfc] sm:$0xf]
        %v596 = vld [vmem:[%s484 + $0x100] sm:$0xf]
        %v597 = vld [vmem:[%s484 + $0x104] sm:$0xf]
        %v598 = vld [vmem:[%s484 + $0x108] sm:$0xf]
        %v599 = vld [vmem:[%s484 + $0x10c] sm:$0xf]
        %v600 = vld [vmem:[%s484 + $0x110] sm:$0xf]
        %v601 = vld [vmem:[%s484 + $0x114] sm:$0xf]
        %v602 = vld [vmem:[%s484 + $0x118] sm:$0xf]
        %v603 = vld [vmem:[%s484 + $0x11c] sm:$0xf]
        %v604 = vld [vmem:[%s484 + $0x120] sm:$0xf]
        %v605 = vld [vmem:[%s484 + $0x124] sm:$0xf]
        %v606 = vld [vmem:[%s484 + $0x128] sm:$0xf]
        %v607 = vld [vmem:[%s484 + $0x12c] sm:$0xf]
        %v608 = vld [vmem:[%s484 + $0x130] sm:$0xf]
        %v609 = vld [vmem:[%s484 + $0x134] sm:$0xf]
        %v610 = vld [vmem:[%s484 + $0x138] sm:$0xf]
        %v611 = vld [vmem:[%s484 + $0x13c] sm:$0xf]
        %v612 = vld [vmem:[%s484 + $0x140] sm:$0xf]
        %v613 = vld [vmem:[%s484 + $0x144] sm:$0xf]
        %v614 = vld [vmem:[%s484 + $0x148] sm:$0xf]
        %v615 = vld [vmem:[%s484 + $0x14c] sm:$0xf]
        %v616 = vld [vmem:[%s484 + $0x150] sm:$0xf]
        %v617 = vld [vmem:[%s484 + $0x154] sm:$0xf]
        %v618 = vld [vmem:[%s484 + $0x158] sm:$0xf]
        %v619 = vld [vmem:[%s484 + $0x15c] sm:$0xf]
        %v620 = vld [vmem:[%s484 + $0x160] sm:$0xf]
        %v621 = vld [vmem:[%s484 + $0x164] sm:$0xf]
        %v622 = vld [vmem:[%s484 + $0x168] sm:$0xf]
        %v623 = vld [vmem:[%s484 + $0x16c] sm:$0xf]
        %v624 = vld [vmem:[%s484 + $0x170] sm:$0xf]
        %v625 = vld [vmem:[%s484 + $0x174] sm:$0xf]
        %v626 = vld [vmem:[%s484 + $0x178] sm:$0xf]
        %v627 = vld [vmem:[%s484 + $0x17c] sm:$0xf]
        %v628 = vld [vmem:[%s484 + $0x180] sm:$0xf]
        %v629 = vld [vmem:[%s484 + $0x184] sm:$0xf]
        %v630 = vld [vmem:[%s484 + $0x188] sm:$0xf]
        %v631 = vld [vmem:[%s484 + $0x18c] sm:$0xf]
        %v632 = vld [vmem:[%s484 + $0x190] sm:$0xf]
        %v633 = vld [vmem:[%s484 + $0x194] sm:$0xf]
        %v634 = vld [vmem:[%s484 + $0x198] sm:$0xf]
        %v635 = vld [vmem:[%s484 + $0x19c] sm:$0xf]
        %v636 = vld [vmem:[%s484 + $0x1a0] sm:$0xf]
        %v637 = vld [vmem:[%s484 + $0x1a4] sm:$0xf]
        %v638 = vld [vmem:[%s484 + $0x1a8] sm:$0xf]
        %v639 = vld [vmem:[%s484 + $0x1ac] sm:$0xf]
        %v640 = vld [vmem:[%s484 + $0x1b0] sm:$0xf]
        %v641 = vld [vmem:[%s484 + $0x1b4] sm:$0xf]
        %v642 = vld [vmem:[%s484 + $0x1b8] sm:$0xf]
        %v643 = vld [vmem:[%s484 + $0x1bc] sm:$0xf]
        %v644 = vld [vmem:[%s484 + $0x1c0] sm:$0xf]
        %v645 = vld [vmem:[%s484 + $0x1c4] sm:$0xf]
        %v646 = vld [vmem:[%s484 + $0x1c8] sm:$0xf]
        %v647 = vld [vmem:[%s484 + $0x1cc] sm:$0xf]
        %v648 = vld [vmem:[%s484 + $0x1d0] sm:$0xf]
        %v649 = vld [vmem:[%s484 + $0x1d4] sm:$0xf]
        %v650 = vld [vmem:[%s484 + $0x1d8] sm:$0xf]
        %v651 = vld [vmem:[%s484 + $0x1dc] sm:$0xf]
        %v652 = vld [vmem:[%s484 + $0x1e0] sm:$0xf]
        %v653 = vld [vmem:[%s484 + $0x1e4] sm:$0xf]
        %v654 = vld [vmem:[%s484 + $0x1e8] sm:$0xf]
        %v655 = vld [vmem:[%s484 + $0x1ec] sm:$0xf]
        %v656 = vld [vmem:[%s484 + $0x1f0] sm:$0xf]
        %v657 = vld [vmem:[%s484 + $0x1f4] sm:$0xf]
        %v658 = vld [vmem:[%s484 + $0x1f8] sm:$0xf]
        %v659 = vld [vmem:[%s484 + $0x1fc] sm:$0xf]
        %v660 = vunpack.c.l.bf16 %v532
        %v661 = vunpack.c.l.bf16 %v533
        %v662 = vunpack.c.l.bf16 %v534
        %v663 = vunpack.c.l.bf16 %v535
        %v664 = vunpack.c.l.bf16 %v536
        %v665 = vunpack.c.l.bf16 %v537
        %v666 = vunpack.c.l.bf16 %v538
        %v667 = vunpack.c.l.bf16 %v539
        %v668 = vunpack.c.l.bf16 %v540
        %v669 = vunpack.c.l.bf16 %v541
        %v670 = vunpack.c.l.bf16 %v542
        %v671 = vunpack.c.l.bf16 %v543
        %v672 = vunpack.c.l.bf16 %v544
        %v673 = vunpack.c.l.bf16 %v545
        %v674 = vunpack.c.l.bf16 %v546
        %v675 = vunpack.c.l.bf16 %v547
        %v676 = vunpack.c.l.bf16 %v548
        %v677 = vunpack.c.l.bf16 %v549
        %v678 = vunpack.c.l.bf16 %v550
        %v679 = vunpack.c.l.bf16 %v551
        %v680 = vunpack.c.l.bf16 %v552
        %v681 = vunpack.c.l.bf16 %v553
        %v682 = vunpack.c.l.bf16 %v554
        %v683 = vunpack.c.l.bf16 %v555
        %v684 = vunpack.c.l.bf16 %v556
        %v685 = vunpack.c.l.bf16 %v557
        %v686 = vunpack.c.l.bf16 %v558
        %v687 = vunpack.c.l.bf16 %v559
        %v688 = vunpack.c.l.bf16 %v560
        %v689 = vunpack.c.l.bf16 %v561
        %v690 = vunpack.c.l.bf16 %v562
        %v691 = vunpack.c.l.bf16 %v563
        %v692 = vunpack.c.l.bf16 %v564
        %v693 = vunpack.c.l.bf16 %v565
        %v694 = vunpack.c.l.bf16 %v566
        %v695 = vunpack.c.l.bf16 %v567
        %v696 = vunpack.c.l.bf16 %v568
        %v697 = vunpack.c.l.bf16 %v569
        %v698 = vunpack.c.l.bf16 %v570
        %v699 = vunpack.c.l.bf16 %v571
        %v700 = vunpack.c.l.bf16 %v572
        %v701 = vunpack.c.l.bf16 %v573
        %v702 = vunpack.c.l.bf16 %v574
        %v703 = vunpack.c.l.bf16 %v575
        %v704 = vunpack.c.l.bf16 %v576
        %v705 = vunpack.c.l.bf16 %v577
        %v706 = vunpack.c.l.bf16 %v578
        %v707 = vunpack.c.l.bf16 %v579
        %v708 = vunpack.c.l.bf16 %v580
        %v709 = vunpack.c.l.bf16 %v581
        %v710 = vunpack.c.l.bf16 %v582
        %v711 = vunpack.c.l.bf16 %v583
        %v712 = vunpack.c.l.bf16 %v584
        %v713 = vunpack.c.l.bf16 %v585
        %v714 = vunpack.c.l.bf16 %v586
        %v715 = vunpack.c.l.bf16 %v587
        %v716 = vunpack.c.l.bf16 %v588
        %v717 = vunpack.c.l.bf16 %v589
        %v718 = vunpack.c.l.bf16 %v590
        %v719 = vunpack.c.l.bf16 %v591
        %v720 = vunpack.c.l.bf16 %v592
        %v721 = vunpack.c.l.bf16 %v593
        %v722 = vunpack.c.l.bf16 %v594
        %v723 = vunpack.c.l.bf16 %v595
        %v724 = vunpack.c.l.bf16 %v596
        %v725 = vunpack.c.l.bf16 %v597
        %v726 = vunpack.c.l.bf16 %v598
        %v727 = vunpack.c.l.bf16 %v599
        %v728 = vunpack.c.l.bf16 %v600
        %v729 = vunpack.c.l.bf16 %v601
        %v730 = vunpack.c.l.bf16 %v602
        %v731 = vunpack.c.l.bf16 %v603
        %v732 = vunpack.c.l.bf16 %v604
        %v733 = vunpack.c.l.bf16 %v605
        %v734 = vunpack.c.l.bf16 %v606
        %v735 = vunpack.c.l.bf16 %v607
        %v736 = vunpack.c.l.bf16 %v608
        %v737 = vunpack.c.l.bf16 %v609
        %v738 = vunpack.c.l.bf16 %v610
        %v739 = vunpack.c.l.bf16 %v611
        %v740 = vunpack.c.l.bf16 %v612
        %v741 = vunpack.c.l.bf16 %v613
        %v742 = vunpack.c.l.bf16 %v614
        %v743 = vunpack.c.l.bf16 %v615
        %v744 = vunpack.c.l.bf16 %v616
        %v745 = vunpack.c.l.bf16 %v617
        %v746 = vunpack.c.l.bf16 %v618
        %v747 = vunpack.c.l.bf16 %v619
        %v748 = vunpack.c.l.bf16 %v620
        %v749 = vunpack.c.l.bf16 %v621
        %v750 = vunpack.c.l.bf16 %v622
        %v751 = vunpack.c.l.bf16 %v623
        %v752 = vunpack.c.l.bf16 %v624
        %v753 = vunpack.c.l.bf16 %v625
        %v754 = vunpack.c.l.bf16 %v626
        %v755 = vunpack.c.l.bf16 %v627
        %v756 = vunpack.c.l.bf16 %v628
        %v757 = vunpack.c.l.bf16 %v629
        %v758 = vunpack.c.l.bf16 %v630
        %v759 = vunpack.c.l.bf16 %v631
        %v760 = vunpack.c.l.bf16 %v632
        %v761 = vunpack.c.l.bf16 %v633
        %v762 = vunpack.c.l.bf16 %v634
        %v763 = vunpack.c.l.bf16 %v635
        %v764 = vunpack.c.l.bf16 %v636
        %v765 = vunpack.c.l.bf16 %v637
        %v766 = vunpack.c.l.bf16 %v638
        %v767 = vunpack.c.l.bf16 %v639
        %v768 = vunpack.c.l.bf16 %v640
        %v769 = vunpack.c.l.bf16 %v641
        %v770 = vunpack.c.l.bf16 %v642
        %v771 = vunpack.c.l.bf16 %v643
        %v772 = vunpack.c.l.bf16 %v644
        %v773 = vunpack.c.l.bf16 %v645
        %v774 = vunpack.c.l.bf16 %v646
        %v775 = vunpack.c.l.bf16 %v647
        %v776 = vunpack.c.l.bf16 %v648
        %v777 = vunpack.c.l.bf16 %v649
        %v778 = vunpack.c.l.bf16 %v650
        %v779 = vunpack.c.l.bf16 %v651
        %v780 = vunpack.c.l.bf16 %v652
        %v781 = vunpack.c.l.bf16 %v653
        %v782 = vunpack.c.l.bf16 %v654
        %v783 = vunpack.c.l.bf16 %v655
        %v784 = vunpack.c.l.bf16 %v656
        %v785 = vunpack.c.l.bf16 %v657
        %v786 = vunpack.c.l.bf16 %v658
        %v787 = vunpack.c.l.bf16 %v659
        %v788 = vld [vmem:[#allocation2] sm:$0xff]
        %v789 = vmax.f32 %v660, %v661
        %v790 = vmax.f32 %v789, %v662
        %v791 = vmax.f32 %v790, %v663
        %v792 = vmax.f32 %v791, %v664
        %v793 = vmax.f32 %v792, %v665
        %v794 = vmax.f32 %v793, %v666
        %v795 = vmax.f32 %v794, %v667
        %v796 = vmax.f32 %v795, %v668
        %v797 = vmax.f32 %v796, %v669
        %v798 = vmax.f32 %v797, %v670
        %v799 = vmax.f32 %v798, %v671
        %v800 = vmax.f32 %v799, %v672
        %v801 = vmax.f32 %v800, %v673
        %v802 = vmax.f32 %v801, %v674
        %v803 = vmax.f32 %v802, %v675
        %v804 = vrot.slane %v803, 4
        %v805 = vmax.f32 %v803, %v804
        %v806 = vrot.slane %v805, 2
        %v807 = vmax.f32 %v805, %v806
        %v808 = vrot.slane %v807, 1
        %v809 = vmax.f32 %v807, %v808
        %v810 = vmax.f32 %v676, %v677
        %v811 = vmax.f32 %v810, %v678
        %v812 = vmax.f32 %v811, %v679
        %v813 = vmax.f32 %v812, %v680
        %v814 = vmax.f32 %v813, %v681
        %v815 = vmax.f32 %v814, %v682
        %v816 = vmax.f32 %v815, %v683
        %v817 = vmax.f32 %v816, %v684
        %v818 = vmax.f32 %v817, %v685
        %v819 = vmax.f32 %v818, %v686
        %v820 = vmax.f32 %v819, %v687
        %v821 = vmax.f32 %v820, %v688
        %v822 = vmax.f32 %v821, %v689
        %v823 = vmax.f32 %v822, %v690
        %v824 = vmax.f32 %v823, %v691
        %v825 = vrot.slane %v824, 4
        %v826 = vmax.f32 %v824, %v825
        %v827 = vrot.slane %v826, 2
        %v828 = vmax.f32 %v826, %v827
        %v829 = vrot.slane %v828, 1
        %v830 = vmax.f32 %v828, %v829
        %v831 = vmax.f32 %v692, %v693
        %v832 = vmax.f32 %v831, %v694
        %v833 = vmax.f32 %v832, %v695
        %v834 = vmax.f32 %v833, %v696
        %v835 = vmax.f32 %v834, %v697
        %v836 = vmax.f32 %v835, %v698
        %v837 = vmax.f32 %v836, %v699
        %v838 = vmax.f32 %v837, %v700
        %v839 = vmax.f32 %v838, %v701
        %v840 = vmax.f32 %v839, %v702
        %v841 = vmax.f32 %v840, %v703
        %v842 = vmax.f32 %v841, %v704
        %v843 = vmax.f32 %v842, %v705
        %v844 = vmax.f32 %v843, %v706
        %v845 = vmax.f32 %v844, %v707
        %v846 = vrot.slane %v845, 4
        %v847 = vmax.f32 %v845, %v846
        %v848 = vrot.slane %v847, 2
        %v849 = vmax.f32 %v847, %v848
        %v850 = vrot.slane %v849, 1
        %v851 = vmax.f32 %v849, %v850
        %v852 = vmax.f32 %v708, %v709
        %v853 = vmax.f32 %v852, %v710
        %v854 = vmax.f32 %v853, %v711
        %v855 = vmax.f32 %v854, %v712
        %v856 = vmax.f32 %v855, %v713
        %v857 = vmax.f32 %v856, %v714
        %v858 = vmax.f32 %v857, %v715
        %v859 = vmax.f32 %v858, %v716
        %v860 = vmax.f32 %v859, %v717
        %v861 = vmax.f32 %v860, %v718
        %v862 = vmax.f32 %v861, %v719
        %v863 = vmax.f32 %v862, %v720
        %v864 = vmax.f32 %v863, %v721
        %v865 = vmax.f32 %v864, %v722
        %v866 = vmax.f32 %v865, %v723
        %v867 = vrot.slane %v866, 4
        %v868 = vmax.f32 %v866, %v867
        %v869 = vrot.slane %v868, 2
        %v870 = vmax.f32 %v868, %v869
        %v871 = vrot.slane %v870, 1
        %v872 = vmax.f32 %v870, %v871
        %v873 = vmax.f32 %v724, %v725
        %v874 = vmax.f32 %v873, %v726
        %v875 = vmax.f32 %v874, %v727
        %v876 = vmax.f32 %v875, %v728
        %v877 = vmax.f32 %v876, %v729
        %v878 = vmax.f32 %v877, %v730
        %v879 = vmax.f32 %v878, %v731
        %v880 = vmax.f32 %v879, %v732
        %v881 = vmax.f32 %v880, %v733
        %v882 = vmax.f32 %v881, %v734
        %v883 = vmax.f32 %v882, %v735
        %v884 = vmax.f32 %v883, %v736
        %v885 = vmax.f32 %v884, %v737
        %v886 = vmax.f32 %v885, %v738
        %v887 = vmax.f32 %v886, %v739
        %v888 = vrot.slane %v887, 4
        %v889 = vmax.f32 %v887, %v888
        %v890 = vrot.slane %v889, 2
        %v891 = vmax.f32 %v889, %v890
        %v892 = vrot.slane %v891, 1
        %v893 = vmax.f32 %v891, %v892
        %v894 = vmax.f32 %v740, %v741
        %v895 = vmax.f32 %v894, %v742
        %v896 = vmax.f32 %v895, %v743
        %v897 = vmax.f32 %v896, %v744
        %v898 = vmax.f32 %v897, %v745
        %v899 = vmax.f32 %v898, %v746
        %v900 = vmax.f32 %v899, %v747
        %v901 = vmax.f32 %v900, %v748
        %v902 = vmax.f32 %v901, %v749
        %v903 = vmax.f32 %v902, %v750
        %v904 = vmax.f32 %v903, %v751
        %v905 = vmax.f32 %v904, %v752
        %v906 = vmax.f32 %v905, %v753
        %v907 = vmax.f32 %v906, %v754
        %v908 = vmax.f32 %v907, %v755
        %v909 = vrot.slane %v908, 4
        %v910 = vmax.f32 %v908, %v909
        %v911 = vrot.slane %v910, 2
        %v912 = vmax.f32 %v910, %v911
        %v913 = vrot.slane %v912, 1
        %v914 = vmax.f32 %v912, %v913
        %v915 = vmax.f32 %v756, %v757
        %v916 = vmax.f32 %v915, %v758
        %v917 = vmax.f32 %v916, %v759
        %v918 = vmax.f32 %v917, %v760
        %v919 = vmax.f32 %v918, %v761
        %v920 = vmax.f32 %v919, %v762
        %v921 = vmax.f32 %v920, %v763
        %v922 = vmax.f32 %v921, %v764
        %v923 = vmax.f32 %v922, %v765
        %v924 = vmax.f32 %v923, %v766
        %v925 = vmax.f32 %v924, %v767
        %v926 = vmax.f32 %v925, %v768
        %v927 = vmax.f32 %v926, %v769
        %v928 = vmax.f32 %v927, %v770
        %v929 = vmax.f32 %v928, %v771
        %v930 = vrot.slane %v929, 4
        %v931 = vmax.f32 %v929, %v930
        %v932 = vrot.slane %v931, 2
        %v933 = vmax.f32 %v931, %v932
        %v934 = vrot.slane %v933, 1
        %v935 = vmax.f32 %v933, %v934
        %v936 = vmax.f32 %v772, %v773
        %v937 = vmax.f32 %v936, %v774
        %v938 = vmax.f32 %v937, %v775
        %v939 = vmax.f32 %v938, %v776
        %v940 = vmax.f32 %v939, %v777
        %v941 = vmax.f32 %v940, %v778
        %v942 = vmax.f32 %v941, %v779
        %v943 = vmax.f32 %v942, %v780
        %v944 = vmax.f32 %v943, %v781
        %v945 = vmax.f32 %v944, %v782
        %v946 = vmax.f32 %v945, %v783
        %v947 = vmax.f32 %v946, %v784
        %v948 = vmax.f32 %v947, %v785
        %v949 = vmax.f32 %v948, %v786
        %v950 = vmax.f32 %v949, %v787
        %v951 = vrot.slane %v950, 4
        %v952 = vmax.f32 %v950, %v951
        %v953 = vrot.slane %v952, 2
        %v954 = vmax.f32 %v952, %v953
        %v955 = vrot.slane %v954, 1
        %v956 = vmax.f32 %v954, %v955
        %vm965 = vcmask 1041409
        %v966 = vsel %vm965, %v830, %v809
        %vm967 = vcmask 1042434
        %v968 = vsel %vm967, %v851, %v966
        %vm969 = vcmask 1043459
        %v970 = vsel %vm969, %v872, %v968
        %vm971 = vcmask 1044484
        %v972 = vsel %vm971, %v893, %v970
        %vm973 = vcmask 1045509
        %v974 = vsel %vm973, %v914, %v972
        %vm975 = vcmask 1046534
        %v976 = vsel %vm975, %v935, %v974
        %vm977 = vcmask 1047559
        %v978 = vsel %vm977, %v956, %v976
        %v980 = vmax.f32 %v788, %v978
        %981 = vst [vmem:[#allocation2] sm:$0xff] %v980
        %p982 = scmp.eq.s32.totalorder %s30, 1
        // Predicated region
        $region89: #{tpu_custom_call.1} parent=79 // pred_check
          %p983 = pneg %p982
        $region90: #{tpu_custom_call.1} parent=79 // pred_check_branch
          %985 = sbr.rel (%p983) target = $region92
        $region91: #{tpu_custom_call.1} parent=79 // pred_region
          %v986 = vld [vmem:[#allocation2] sm:$0xff]
          %v987 = vld [vmem:[%s1] sm:$0xff]
          %v988 = vld [vmem:[%s1 + $0x8] sm:$0xff]
          %v989 = vld [vmem:[%s1 + $0x10] sm:$0xff]
          %v990 = vld [vmem:[%s1 + $0x18] sm:$0xff]
          %v991 = vld [vmem:[%s1 + $0x20] sm:$0xff]
          %v992 = vld [vmem:[%s1 + $0x28] sm:$0xff]
          %v993 = vld [vmem:[%s1 + $0x30] sm:$0xff]
          %v994 = vld [vmem:[%s1 + $0x38] sm:$0xff]
          %v995 = vld [vmem:[%s1 + $0x40] sm:$0xff]
          %v996 = vld [vmem:[%s1 + $0x48] sm:$0xff]
          %v997 = vld [vmem:[%s1 + $0x50] sm:$0xff]
          %v998 = vld [vmem:[%s1 + $0x58] sm:$0xff]
          %v999 = vld [vmem:[%s1 + $0x60] sm:$0xff]
          %v1000 = vld [vmem:[%s1 + $0x68] sm:$0xff]
          %v1001 = vld [vmem:[%s1 + $0x70] sm:$0xff]
          %v1002 = vld [vmem:[%s1 + $0x78] sm:$0xff]
          %v1003 = vld [vmem:[%s2] sm:$0x1]
          %v1005 = vlaneseq
          %v1006 = vshrl.u32 %v1005, 7
          %v1007 = vsub.s32 0, %v1006
          %v1008 = vrot.slane %v1003, %v1007
          %1010 = vmatprep.subr.mxu0 0.0
          %1011 = vmatpush1.msra.mxu0 %v987
          %1012 = vmatprep.subr.mxu0 0.0
          %1013 = vmatpush1.msra.mxu0 %v988
          %1014 = vmatprep.subr.mxu0 0.0
          %1015 = vmatpush1.msra.mxu0 %v989
          %1016 = vmatprep.subr.mxu0 0.0
          %1017 = vmatpush1.msra.mxu0 %v990
          %1018 = vmatprep.subr.mxu0 0.0
          %1019 = vmatpush1.msra.mxu0 %v991
          %1020 = vmatprep.subr.mxu0 0.0
          %1021 = vmatpush1.msra.mxu0 %v992
          %1022 = vmatprep.subr.mxu0 0.0
          %1023 = vmatpush1.msra.mxu0 %v993
          %1024 = vmatprep.subr.mxu0 0.0
          %1025 = vmatpush1.msra.mxu0 %v994
          %1026 = vmatprep.subr.mxu0 0.0
          %1027 = vmatpush1.msra.mxu0 %v995
          %1028 = vmatprep.subr.mxu0 0.0
          %1029 = vmatpush1.msra.mxu0 %v996
          %1030 = vmatprep.subr.mxu0 0.0
          %1031 = vmatpush1.msra.mxu0 %v997
          %1032 = vmatprep.subr.mxu0 0.0
          %1033 = vmatpush1.msra.mxu0 %v998
          %1034 = vmatprep.subr.mxu0 0.0
          %1035 = vmatpush1.msra.mxu0 %v999
          %1036 = vmatprep.subr.mxu0 0.0
          %1037 = vmatpush1.msra.mxu0 %v1000
          %1038 = vmatprep.subr.mxu0 0.0
          %1039 = vmatpush1.msra.mxu0 %v1001
          %1040 = vmatprep.subr.mxu0 0.0
          %1041 = vmatpush1.msra.mxu0 %v1002
          %1042 = vmatprep.subr.mxu0 0.0
          %1043 = vmatpush1.msra.mxu0 0.0
          %1044 = vmatprep.subr.mxu0 0.0
          %1045 = vmatpush1.msra.mxu0 0.0
          %1046 = vmatprep.subr.mxu0 0.0
          %1047 = vmatpush1.msra.mxu0 0.0
          %1048 = vmatprep.subr.mxu0 0.0
          %1049 = vmatpush1.msra.mxu0 0.0
          %1050 = vmatprep.subr.mxu0 0.0
          %1051 = vmatpush1.msra.mxu0 0.0
          %1052 = vmatprep.subr.mxu0 0.0
          %1053 = vmatpush1.msra.mxu0 0.0
          %1054 = vmatprep.subr.mxu0 0.0
          %1055 = vmatpush1.msra.mxu0 0.0
          %1056 = vmatprep.subr.mxu0 0.0
          %1057 = vmatpush1.msra.mxu0 0.0
          %1058 = vmatprep.subr.mxu0 0.0
          %1059 = vmatpush1.msra.mxu0 0.0
          %1060 = vmatprep.subr.mxu0 0.0
          %1061 = vmatpush1.msra.mxu0 0.0
          %1062 = vmatprep.subr.mxu0 0.0
          %1063 = vmatpush1.msra.mxu0 0.0
          %1064 = vmatprep.subr.mxu0 0.0
          %1065 = vmatpush1.msra.mxu0 0.0
          %1066 = vmatprep.subr.mxu0 0.0
          %1067 = vmatpush1.msra.mxu0 0.0
          %1068 = vmatprep.subr.mxu0 0.0
          %1069 = vmatpush1.msra.mxu0 0.0
          %1070 = vmatprep.subr.mxu0 0.0
          %1071 = vmatpush1.msra.mxu0 0.0
          %1072 = vmatprep.subr.mxu0 0.0
          %1073 = vmatpush1.msra.mxu0 0.0
          %1074 = vmatprep.mubr.f32.mxu0 0.0
          %1075 = vmatmul.mubr.f32.gmra.mrb[0].mxu0 %v986
          %v1076 = vpop.f32.mrb[0].mxu0
          %v1077 = vadd.f32 %v1008, %v1076
          %v1078 = vpop.f32.mrb[0].mxu0
          %1079 = vdwg.mxu0
          %v1080 = vld [vmem:[%s3] sm:$0x1]
          %v1081 = vld [vmem:[%s4] sm:$0x1]
          %vm1082 = vcmask 523264
          %v1083 = vsel %vm1082, %v1077, 0.0
          %v1084 = vrot.slane %v1083, 4
          %v1085 = vadd.f32 %v1083, %v1084
          %v1086 = vrot.slane %v1085, 2
          %v1087 = vadd.f32 %v1085, %v1086
          %v1088 = vrot.slane %v1087, 1
          %v1089 = vadd.f32 %v1087, %v1088
          %v1090 = vrcp.pop 8.0
          %v1091 = vmul.f32 %v1089, %v1090
          %v1092 = vmul.f32 %v1077, %v1077
          %v1093 = vsel %vm1082, %v1092, 0.0
          %v1094 = vrot.slane %v1093, 4
          %v1095 = vadd.f32 %v1093, %v1094
          %v1096 = vrot.slane %v1095, 2
          %v1097 = vadd.f32 %v1095, %v1096
          %v1098 = vrot.slane %v1097, 1
          %v1099 = vadd.f32 %v1097, %v1098
          %v1100 = vmul.f32 %v1099, %v1090
          %v1101 = vmul.f32 %v1091, %v1091
          %v1102 = vsub.f32 %v1100, %v1101
          %v1103 = vmax.f32 %v1102, 0.0
          %v1104 = vsub.f32 %v1077, %v1091
          %v1105 = vadd.f32 %v1103, 1e-05
          %v1106 = vrsqrt.pop %v1105
          %v1107 = vmul.f32 %v1104, %v1106
          %v1109 = vlaneseq
          %v1110 = vshrl.u32 %v1109, 7
          %v1111 = vsub.s32 0, %v1110
          %v1112 = vrot.slane %v1080, %v1111
          %v1114 = vmul.f32 %v1107, %v1112
          %v1116 = vlaneseq
          %v1117 = vshrl.u32 %v1116, 7
          %v1118 = vsub.s32 0, %v1117
          %v1119 = vrot.slane %v1081, %v1118
          %v1121 = vadd.f32 %v1114, %v1119
          %v1122 = vmax.f32 %v1121, 0.0
          %v1123 = vld [vmem:[%s5] sm:$0xff]
          %v1124 = vld [vmem:[%s5 + $0x8] sm:$0xff]
          %v1125 = vld [vmem:[%s5 + $0x10] sm:$0xff]
          %v1126 = vld [vmem:[%s5 + $0x18] sm:$0xff]
          %v1127 = vld [vmem:[%s5 + $0x20] sm:$0xff]
          %v1128 = vld [vmem:[%s5 + $0x28] sm:$0xff]
          %v1129 = vld [vmem:[%s5 + $0x30] sm:$0xff]
          %v1130 = vld [vmem:[%s5 + $0x38] sm:$0xff]
          %v1131 = vld [vmem:[%s6] sm:$0x1]
          %v1133 = vlaneseq
          %v1134 = vshrl.u32 %v1133, 7
          %v1135 = vsub.s32 0, %v1134
          %v1136 = vrot.slane %v1131, %v1135
          %v1139 = vsel %vm1082, %v1122, 0
          %1141 = vmatprep.subr.mxu0 0.0
          %1142 = vmatpush1.msra.mxu0 %v1123
          %1143 = vmatprep.subr.mxu0 0.0
          %1144 = vmatpush1.msra.mxu0 %v1124
          %1145 = vmatprep.subr.mxu0 0.0
          %1146 = vmatpush1.msra.mxu0 %v1125
          %1147 = vmatprep.subr.mxu0 0.0
          %1148 = vmatpush1.msra.mxu0 %v1126
          %1149 = vmatprep.subr.mxu0 0.0
          %1150 = vmatpush1.msra.mxu0 %v1127
          %1151 = vmatprep.subr.mxu0 0.0
          %1152 = vmatpush1.msra.mxu0 %v1128
          %1153 = vmatprep.subr.mxu0 0.0
          %1154 = vmatpush1.msra.mxu0 %v1129
          %1155 = vmatprep.subr.mxu0 0.0
          %1156 = vmatpush1.msra.mxu0 %v1130
          %1157 = vmatprep.subr.mxu0 0.0
          %1158 = vmatpush1.msra.mxu0 0.0
          %1159 = vmatprep.subr.mxu0 0.0
          %1160 = vmatpush1.msra.mxu0 0.0
          %1161 = vmatprep.subr.mxu0 0.0
          %1162 = vmatpush1.msra.mxu0 0.0
          %1163 = vmatprep.subr.mxu0 0.0
          %1164 = vmatpush1.msra.mxu0 0.0
          %1165 = vmatprep.subr.mxu0 0.0
          %1166 = vmatpush1.msra.mxu0 0.0
          %1167 = vmatprep.subr.mxu0 0.0
          %1168 = vmatpush1.msra.mxu0 0.0
          %1169 = vmatprep.subr.mxu0 0.0
          %1170 = vmatpush1.msra.mxu0 0.0
          %1171 = vmatprep.subr.mxu0 0.0
          %1172 = vmatpush1.msra.mxu0 0.0
          %1173 = vmatprep.subr.mxu0 0.0
          %1174 = vmatpush1.msra.mxu0 0.0
          %1175 = vmatprep.subr.mxu0 0.0
          %1176 = vmatpush1.msra.mxu0 0.0
          %1177 = vmatprep.subr.mxu0 0.0
          %1178 = vmatpush1.msra.mxu0 0.0
          %1179 = vmatprep.subr.mxu0 0.0
          %1180 = vmatpush1.msra.mxu0 0.0
          %1181 = vmatprep.subr.mxu0 0.0
          %1182 = vmatpush1.msra.mxu0 0.0
          %1183 = vmatprep.subr.mxu0 0.0
          %1184 = vmatpush1.msra.mxu0 0.0
          %1185 = vmatprep.subr.mxu0 0.0
          %1186 = vmatpush1.msra.mxu0 0.0
          %1187 = vmatprep.subr.mxu0 0.0
          %1188 = vmatpush1.msra.mxu0 0.0
          %1189 = vmatprep.subr.mxu0 0.0
          %1190 = vmatpush1.msra.mxu0 0.0
          %1191 = vmatprep.subr.mxu0 0.0
          %1192 = vmatpush1.msra.mxu0 0.0
          %1193 = vmatprep.subr.mxu0 0.0
          %1194 = vmatpush1.msra.mxu0 0.0
          %1195 = vmatprep.subr.mxu0 0.0
          %1196 = vmatpush1.msra.mxu0 0.0
          %1197 = vmatprep.subr.mxu0 0.0
          %1198 = vmatpush1.msra.mxu0 0.0
          %1199 = vmatprep.subr.mxu0 0.0
          %1200 = vmatpush1.msra.mxu0 0.0
          %1201 = vmatprep.subr.mxu0 0.0
          %1202 = vmatpush1.msra.mxu0 0.0
          %1203 = vmatprep.subr.mxu0 0.0
          %1204 = vmatpush1.msra.mxu0 0.0
          %1205 = vmatprep.mubr.f32.mxu0 0.0
          %1206 = vmatmul.mubr.f32.gmra.mrb[0].mxu0 %v1139
          %v1207 = vpop.f32.mrb[0].mxu0
          %v1208 = vadd.f32 %v1136, %v1207
          %v1209 = vpop.f32.mrb[0].mxu0
          %1210 = vdwg.mxu0
          %v1211 = vld [vmem:[%s7] sm:$0x1]
          %v1212 = vld [vmem:[%s8] sm:$0x1]
          %vm1213 = vcmask 261120
          %v1214 = vsel %vm1213, %v1208, 0.0
          %v1215 = vrot.slane %v1214, 4
          %v1216 = vadd.f32 %v1214, %v1215
          %v1217 = vrot.slane %v1216, 2
          %v1218 = vadd.f32 %v1216, %v1217
          %v1219 = vrot.slane %v1218, 1
          %v1220 = vadd.f32 %v1218, %v1219
          %v1221 = vmul.f32 %v1220, %v1090
          %v1222 = vmul.f32 %v1208, %v1208
          %v1223 = vsel %vm1213, %v1222, 0.0
          %v1224 = vrot.slane %v1223, 4
          %v1225 = vadd.f32 %v1223, %v1224
          %v1226 = vrot.slane %v1225, 2
          %v1227 = vadd.f32 %v1225, %v1226
          %v1228 = vrot.slane %v1227, 1
          %v1229 = vadd.f32 %v1227, %v1228
          %v1230 = vmul.f32 %v1229, %v1090
          %v1231 = vmul.f32 %v1221, %v1221
          %v1232 = vsub.f32 %v1230, %v1231
          %v1233 = vmax.f32 %v1232, 0.0
          %v1234 = vsub.f32 %v1208, %v1221
          %v1235 = vadd.f32 %v1233, 1e-05
          %v1236 = vrsqrt.pop %v1235
          %v1237 = vmul.f32 %v1234, %v1236
          %v1239 = vlaneseq
          %v1240 = vshrl.u32 %v1239, 7
          %v1241 = vsub.s32 0, %v1240
          %v1242 = vrot.slane %v1211, %v1241
          %v1244 = vmul.f32 %v1237, %v1242
          %v1246 = vlaneseq
          %v1247 = vshrl.u32 %v1246, 7
          %v1248 = vsub.s32 0, %v1247
          %v1249 = vrot.slane %v1212, %v1248
          %v1251 = vadd.f32 %v1244, %v1249
          %v1252 = vmax.f32 %v1251, 0.0
          %v1253 = vld [vmem:[%s9] sm:$0xff]
          %v1254 = vld [vmem:[%s9 + $0x8] sm:$0xff]
          %v1255 = vld [vmem:[%s9 + $0x10] sm:$0xff]
          %v1256 = vld [vmem:[%s9 + $0x18] sm:$0xff]
          %v1257 = vld [vmem:[%s10] sm:$0x1]
          %v1259 = vlaneseq
          %v1260 = vshrl.u32 %v1259, 7
          %v1261 = vsub.s32 0, %v1260
          %v1262 = vrot.slane %v1257, %v1261
          %v1265 = vsel %vm1213, %v1252, 0
          %1267 = vmatprep.subr.mxu0 0.0
          %1268 = vmatpush1.msra.mxu0 %v1253
          %1269 = vmatprep.subr.mxu0 0.0
          %1270 = vmatpush1.msra.mxu0 %v1254
          %1271 = vmatprep.subr.mxu0 0.0
          %1272 = vmatpush1.msra.mxu0 %v1255
          %1273 = vmatprep.subr.mxu0 0.0
          %1274 = vmatpush1.msra.mxu0 %v1256
          %1275 = vmatprep.subr.mxu0 0.0
          %1276 = vmatpush1.msra.mxu0 0.0
          %1277 = vmatprep.subr.mxu0 0.0
          %1278 = vmatpush1.msra.mxu0 0.0
          %1279 = vmatprep.subr.mxu0 0.0
          %1280 = vmatpush1.msra.mxu0 0.0
          %1281 = vmatprep.subr.mxu0 0.0
          %1282 = vmatpush1.msra.mxu0 0.0
          %1283 = vmatprep.subr.mxu0 0.0
          %1284 = vmatpush1.msra.mxu0 0.0
          %1285 = vmatprep.subr.mxu0 0.0
          %1286 = vmatpush1.msra.mxu0 0.0
          %1287 = vmatprep.subr.mxu0 0.0
          %1288 = vmatpush1.msra.mxu0 0.0
          %1289 = vmatprep.subr.mxu0 0.0
          %1290 = vmatpush1.msra.mxu0 0.0
          %1291 = vmatprep.subr.mxu0 0.0
          %1292 = vmatpush1.msra.mxu0 0.0
          %1293 = vmatprep.subr.mxu0 0.0
          %1294 = vmatpush1.msra.mxu0 0.0
          %1295 = vmatprep.subr.mxu0 0.0
          %1296 = vmatpush1.msra.mxu0 0.0
          %1297 = vmatprep.subr.mxu0 0.0
          %1298 = vmatpush1.msra.mxu0 0.0
          %1299 = vmatprep.subr.mxu0 0.0
          %1300 = vmatpush1.msra.mxu0 0.0
          %1301 = vmatprep.subr.mxu0 0.0
          %1302 = vmatpush1.msra.mxu0 0.0
          %1303 = vmatprep.subr.mxu0 0.0
          %1304 = vmatpush1.msra.mxu0 0.0
          %1305 = vmatprep.subr.mxu0 0.0
          %1306 = vmatpush1.msra.mxu0 0.0
          %1307 = vmatprep.subr.mxu0 0.0
          %1308 = vmatpush1.msra.mxu0 0.0
          %1309 = vmatprep.subr.mxu0 0.0
          %1310 = vmatpush1.msra.mxu0 0.0
          %1311 = vmatprep.subr.mxu0 0.0
          %1312 = vmatpush1.msra.mxu0 0.0
          %1313 = vmatprep.subr.mxu0 0.0
          %1314 = vmatpush1.msra.mxu0 0.0
          %1315 = vmatprep.subr.mxu0 0.0
          %1316 = vmatpush1.msra.mxu0 0.0
          %1317 = vmatprep.subr.mxu0 0.0
          %1318 = vmatpush1.msra.mxu0 0.0
          %1319 = vmatprep.subr.mxu0 0.0
          %1320 = vmatpush1.msra.mxu0 0.0
          %1321 = vmatprep.subr.mxu0 0.0
          %1322 = vmatpush1.msra.mxu0 0.0
          %1323 = vmatprep.subr.mxu0 0.0
          %1324 = vmatpush1.msra.mxu0 0.0
          %1325 = vmatprep.subr.mxu0 0.0
          %1326 = vmatpush1.msra.mxu0 0.0
          %1327 = vmatprep.subr.mxu0 0.0
          %1328 = vmatpush1.msra.mxu0 0.0
          %1329 = vmatprep.subr.mxu0 0.0
          %1330 = vmatpush1.msra.mxu0 0.0
          %1331 = vmatprep.mubr.f32.mxu0 0.0
          %1332 = vmatmul.mubr.f32.gmra.mrb[0].mxu0 %v1265
          %v1333 = vpop.f32.mrb[0].mxu0
          %v1334 = vadd.f32 %v1262, %v1333
          %v1335 = vpop.f32.mrb[0].mxu0
          %1336 = vdwg.mxu0
          %v1337 = vld [vmem:[%s11] sm:$0x1]
          %v1338 = vld [vmem:[%s12] sm:$0x1]
          %vm1339 = vcmask 130048
          %v1340 = vsel %vm1339, %v1334, 0.0
          %v1341 = vrot.slane %v1340, 4
          %v1342 = vadd.f32 %v1340, %v1341
          %v1343 = vrot.slane %v1342, 2
          %v1344 = vadd.f32 %v1342, %v1343
          %v1345 = vrot.slane %v1344, 1
          %v1346 = vadd.f32 %v1344, %v1345
          %v1347 = vmul.f32 %v1346, %v1090
          %v1348 = vmul.f32 %v1334, %v1334
          %v1349 = vsel %vm1339, %v1348, 0.0
          %v1350 = vrot.slane %v1349, 4
          %v1351 = vadd.f32 %v1349, %v1350
          %v1352 = vrot.slane %v1351, 2
          %v1353 = vadd.f32 %v1351, %v1352
          %v1354 = vrot.slane %v1353, 1
          %v1355 = vadd.f32 %v1353, %v1354
          %v1356 = vmul.f32 %v1355, %v1090
          %v1357 = vmul.f32 %v1347, %v1347
          %v1358 = vsub.f32 %v1356, %v1357
          %v1359 = vmax.f32 %v1358, 0.0
          %v1360 = vsub.f32 %v1334, %v1347
          %v1361 = vadd.f32 %v1359, 1e-05
          %v1362 = vrsqrt.pop %v1361
          %v1363 = vmul.f32 %v1360, %v1362
          %v1365 = vlaneseq
          %v1366 = vshrl.u32 %v1365, 7
          %v1367 = vsub.s32 0, %v1366
          %v1368 = vrot.slane %v1337, %v1367
          %v1370 = vmul.f32 %v1363, %v1368
          %v1372 = vlaneseq
          %v1373 = vshrl.u32 %v1372, 7
          %v1374 = vsub.s32 0, %v1373
          %v1375 = vrot.slane %v1338, %v1374
          %v1377 = vadd.f32 %v1370, %v1375
          %v1378 = vmax.f32 %v1377, 0.0
          %v1379 = vld [vmem:[%s13] sm:$0xff]
          %v1380 = vld [vmem:[%s13 + $0x8] sm:$0xff]
          %v1381 = vld [vmem:[%s14] sm:$0x1]
          %v1383 = vlaneseq
          %v1384 = vshrl.u32 %v1383, 7
          %v1385 = vsub.s32 0, %v1384
          %v1386 = vrot.slane %v1381, %v1385
          %v1389 = vsel %vm1339, %v1378, 0
          %1391 = vmatprep.subr.mxu0 0.0
          %1392 = vmatpush1.msra.mxu0 %v1379
          %1393 = vmatprep.subr.mxu0 0.0
          %1394 = vmatpush1.msra.mxu0 %v1380
          %1395 = vmatprep.subr.mxu0 0.0
          %1396 = vmatpush1.msra.mxu0 0.0
          %1397 = vmatprep.subr.mxu0 0.0
          %1398 = vmatpush1.msra.mxu0 0.0
          %1399 = vmatprep.subr.mxu0 0.0
          %1400 = vmatpush1.msra.mxu0 0.0
          %1401 = vmatprep.subr.mxu0 0.0
          %1402 = vmatpush1.msra.mxu0 0.0
          %1403 = vmatprep.subr.mxu0 0.0
          %1404 = vmatpush1.msra.mxu0 0.0
          %1405 = vmatprep.subr.mxu0 0.0
          %1406 = vmatpush1.msra.mxu0 0.0
          %1407 = vmatprep.subr.mxu0 0.0
          %1408 = vmatpush1.msra.mxu0 0.0
          %1409 = vmatprep.subr.mxu0 0.0
          %1410 = vmatpush1.msra.mxu0 0.0
          %1411 = vmatprep.subr.mxu0 0.0
          %1412 = vmatpush1.msra.mxu0 0.0
          %1413 = vmatprep.subr.mxu0 0.0
          %1414 = vmatpush1.msra.mxu0 0.0
          %1415 = vmatprep.subr.mxu0 0.0
          %1416 = vmatpush1.msra.mxu0 0.0
          %1417 = vmatprep.subr.mxu0 0.0
          %1418 = vmatpush1.msra.mxu0 0.0
          %1419 = vmatprep.subr.mxu0 0.0
          %1420 = vmatpush1.msra.mxu0 0.0
          %1421 = vmatprep.subr.mxu0 0.0
          %1422 = vmatpush1.msra.mxu0 0.0
          %1423 = vmatprep.subr.mxu0 0.0
          %1424 = vmatpush1.msra.mxu0 0.0
          %1425 = vmatprep.subr.mxu0 0.0
          %1426 = vmatpush1.msra.mxu0 0.0
          %1427 = vmatprep.subr.mxu0 0.0
          %1428 = vmatpush1.msra.mxu0 0.0
          %1429 = vmatprep.subr.mxu0 0.0
          %1430 = vmatpush1.msra.mxu0 0.0
          %1431 = vmatprep.subr.mxu0 0.0
          %1432 = vmatpush1.msra.mxu0 0.0
          %1433 = vmatprep.subr.mxu0 0.0
          %1434 = vmatpush1.msra.mxu0 0.0
          %1435 = vmatprep.subr.mxu0 0.0
          %1436 = vmatpush1.msra.mxu0 0.0
          %1437 = vmatprep.subr.mxu0 0.0
          %1438 = vmatpush1.msra.mxu0 0.0
          %1439 = vmatprep.subr.mxu0 0.0
          %1440 = vmatpush1.msra.mxu0 0.0
          %1441 = vmatprep.subr.mxu0 0.0
          %1442 = vmatpush1.msra.mxu0 0.0
          %1443 = vmatprep.subr.mxu0 0.0
          %1444 = vmatpush1.msra.mxu0 0.0
          %1445 = vmatprep.subr.mxu0 0.0
          %1446 = vmatpush1.msra.mxu0 0.0
          %1447 = vmatprep.subr.mxu0 0.0
          %1448 = vmatpush1.msra.mxu0 0.0
          %1449 = vmatprep.subr.mxu0 0.0
          %1450 = vmatpush1.msra.mxu0 0.0
          %1451 = vmatprep.subr.mxu0 0.0
          %1452 = vmatpush1.msra.mxu0 0.0
          %1453 = vmatprep.subr.mxu0 0.0
          %1454 = vmatpush1.msra.mxu0 0.0
          %1455 = vmatprep.mubr.f32.mxu0 0.0
          %1456 = vmatmul.mubr.f32.gmra.mrb[0].mxu0 %v1389
          %v1457 = vpop.f32.mrb[0].mxu0
          %v1458 = vadd.f32 %v1386, %v1457
          %v1459 = vpop.f32.mrb[0].mxu0
          %1460 = vdwg.mxu0
          %v1461 = vmul.f32 %v1458, %v1458
          %vm1462 = vcmask 31744
          %v1463 = vsel %vm1462, %v1461, 0.0
          %1464 = vadd.xlane.f32.xlu0 %v1463
          %v1465 = vpop.xlane.xlu0 %1464
          %v1466 = vrsqrt.pop %v1465
          %v1467 = vlaneseq
          %v1468 = vand.u32 %v1467, 127
          %vm1469 = vcmp.lt.s32.totalorder %v1468, 4
          %v1470 = vmul.f32 %v1458, %v1466
          %v1471 = vsel %vm1469, %v1470, %v1458
          %vm1472 = vcmask 64512
          %1473 = vst.msk [vmem:[#allocation6] sm:$0xff] %vm1472, %v1471
        $region92: #{tpu_custom_call.1} parent=79 // pred_fallthru
          _
        // Predicated region
        $region93: #{tpu_custom_call.1} parent=79 // pred_check
          %p1474 = pneg %p363
        $region94: #{tpu_custom_call.1} parent=79 // pred_check_branch
          %1476 = sbr.rel (%p1474) target = $region96
        $region95: #{tpu_custom_call.1} parent=79 // pred_region
          %s1478 = ssub.s32 128, 128
          %1479 = vsyncadd [#allocation5], %s1478
          %s1481 = sshll.u32 [#allocation6], 4
          %s1482 = int_to_ptr.vmem [resolvable:$true] %s1481
          %1484 = dma.vmem_to_hbm [thread:$0]  %s1482, 128, %s15, [#allocation5]
        $region96: #{tpu_custom_call.1} parent=79 // pred_fallthru
          _
        // Predicated region
        $region97: #{tpu_custom_call.1} parent=79 // pred_check
          %p1485 = pneg %p363
        $region98: #{tpu_custom_call.1} parent=79 // pred_check_branch
          %1487 = sbr.rel (%p1485) target = $region100
        $region99: #{tpu_custom_call.1} parent=79 // pred_region
          %1488 = dma.done [#allocation5], 128
        $region100: #{tpu_custom_call.1} parent=79 // pred_fallthru
          _
      $region80: #{tpu_custom_call.1} parent=5 // pred_fallthru
        _
      %p1489 = scmp.le.s32.totalorder 2, %s25
      // Predicated region
      $region101: #{tpu_custom_call.1} parent=5 // pred_check
        %p1490 = pneg %p1489
      $region102: #{tpu_custom_call.1} parent=5 // pred_check_branch
        %1492 = sbr.rel (%p1490) target = $region104
      $region103: #{tpu_custom_call.1} parent=5 // pred_region
        %s1493 = ssub.s32 %s25, 2
      $region104: #{tpu_custom_call.1} parent=5 // pred_fallthru
        _
    $region6: #{tpu_custom_call.1} parent=1 // loop_footer
      %s29 = sadd.s32 1, %s25
    $region7: #{tpu_custom_call.1} parent=1 // loop_footer_branch
      %24 = sbr.rel target = $region3
    $region8: #{tpu_custom_call.1} parent=1 // loop_exit
      _
    %1494 = vsyncpa [#allocation4], 1
    %s1495 = scalar_lea.sflag [#allocation4], 1
    %1496 = vsyncpa %s1495, 1
    %1497 = vsyncpa [#allocation5], 1
    %s1498 = scalar_lea.sflag [#allocation5], 1
    %1499 = vsyncpa %s1498, 1

</llo_original>
